<compile_context>
chip_gen: v7x
topology: tpu7x:2x2x1
jax: 0.10.0
libtpu: 0.0.40
codegen_flags: <defaults>
</compile_context>

<pallas_src>
import jax
import jax.numpy as jnp
from jax import lax
from jax.experimental import pallas as pl
from jax.experimental.pallas import tpu as pltpu

_LANE = 128


def _round_up(n, m):
    return ((n + m - 1) // m) * m


def _elu(x, alpha):
    # PyTorch nn.ELU(alpha): x if x > 0 else alpha * (exp(x) - 1)
    return jnp.where(x > 0, x, alpha * (jnp.exp(x) - 1.0))


def _discriminator_kernel(x_ref,
                          w1_ref, b1_ref,
                          w2_ref, b2_ref,
                          w3_ref, b3_ref,
                          w4_ref, b4_ref,
                          o_ref):
    alpha = 0.2
    x = x_ref[...]  # already bf16 from the boundary; no redundant cast

    # fc1 + ELU (Dropout(0.3) -> identity in eval)
    h1 = jnp.dot(x, w1_ref[...], preferred_element_type=jnp.float32) + b1_ref[...]
    h1 = _elu(h1, alpha)

    # fc2 + ELU
    h2 = jnp.dot(h1.astype(jnp.bfloat16), w2_ref[...],
                 preferred_element_type=jnp.float32) + b2_ref[...]
    h2 = _elu(h2, alpha)

    # fc3 + ELU
    h3 = jnp.dot(h2.astype(jnp.bfloat16), w3_ref[...],
                 preferred_element_type=jnp.float32) + b3_ref[...]
    h3 = _elu(h3, alpha)

    # fc4 (out_features=1) + sigmoid: contract over the feature axis of BOTH
    # operands (q@k.T-style dimension numbers) so the result is (1, block_batch)
    # -> the output store is lane-dense, no masked vst and no sublane->lane
    # relayout inside the kernel.
    h4 = lax.dot_general(w4_ref[...], h3.astype(jnp.bfloat16),
                         dimension_numbers=(((1,), (1,)), ((), ())),
                         preferred_element_type=jnp.float32)
    h4 = h4 + b4_ref[...]
    o_ref[...] = jax.nn.sigmoid(h4).astype(o_ref.dtype)


def discriminator_mnist(x, params, *, block_batch=256,
                        compute_dtype=jnp.bfloat16):
    """Fused forward pass.

    x: (B, data_dim) float32. params: dict with w1..w4 (in,out) and b1..b4.
    Returns (B, 1) float32 probabilities.
    """
    B, D = x.shape
    H1 = params["w1"].shape[1]
    H2 = params["w2"].shape[1]
    H3 = params["w3"].shape[1]

    # Lane-aligned (multiple-of-128) padded sizes. Zero padding is exact:
    # padded feature columns get ELU(0)=0 and meet zero weight rows downstream.
    block_batch = max(_LANE, _round_up(block_batch, _LANE))
    Dp = _round_up(D, _LANE)
    H1p = _round_up(H1, _LANE)
    H2p = _round_up(H2, _LANE)
    H3p = _round_up(H3, _LANE)
    Bp = _round_up(B, block_batch)
    n_blocks = Bp // block_batch

    def pad2(a, r, c):
        return jnp.pad(a, ((0, r - a.shape[0]), (0, c - a.shape[1])))

    x_p = pad2(x, Bp, Dp).astype(compute_dtype)
    w1 = pad2(params["w1"], Dp, H1p).astype(compute_dtype)
    w2 = pad2(params["w2"], H1p, H2p).astype(compute_dtype)
    w3 = pad2(params["w3"], H2p, H3p).astype(compute_dtype)
    # fc4 weight stored as a (1, H3p) row vector.
    w4 = pad2(params["w4"].reshape(H3, 1).T, 1, H3p).astype(compute_dtype)
    b1 = pad2(params["b1"].reshape(1, H1), 1, H1p).astype(jnp.float32)
    b2 = pad2(params["b2"].reshape(1, H2), 1, H2p).astype(jnp.float32)
    b3 = pad2(params["b3"].reshape(1, H3), 1, H3p).astype(jnp.float32)
    b4 = params["b4"].reshape(1, 1).astype(jnp.float32)

    def full_spec(shape):
        # Weights/biases: full-array blocks, resident across the batch grid axis.
        return pl.BlockSpec(shape, lambda i: tuple(0 for _ in shape))

    out = pl.pallas_call(
        _discriminator_kernel,
        out_shape=jax.ShapeDtypeStruct((n_blocks, block_batch), jnp.float32),
        grid_spec=pltpu.PrefetchScalarGridSpec(
            num_scalar_prefetch=0,
            grid=(n_blocks,),
            in_specs=[
                pl.BlockSpec((block_batch, Dp), lambda i: (i, 0)),  # x tile
                full_spec((Dp, H1p)), full_spec((1, H1p)),
                full_spec((H1p, H2p)), full_spec((1, H2p)),
                full_spec((H2p, H3p)), full_spec((1, H3p)),
                full_spec((1, H3p)), full_spec((1, 1)),
            ],
            out_specs=pl.BlockSpec((1, block_batch), lambda i: (i, 0)),
        ),
        compiler_params=pltpu.CompilerParams(
            dimension_semantics=("parallel",),
            # Explicit scoped-VMEM budget: safe on v5e/v6e (128 MiB physical)
            # and within v7x's 64 MiB per-TC VMEM.
            vmem_limit_bytes=32 * 1024 * 1024,
        ),
    )(x_p, w1, b1, w2, b2, w3, b3, w4, b4)

    # (n_blocks, block_batch) row-major == batch order; trim padding.
    return out.reshape(Bp, 1)[:B]


def init_params(key, data_dim, hidden_size):
    """Deterministic init mimicking nn.Linear shapes (stored as (in, out))."""
    dims = [(data_dim, hidden_size),
            (hidden_size, hidden_size // 2),
            (hidden_size // 2, hidden_size // 4),
            (hidden_size // 4, 1)]
    params = {}
    for idx, (fan_in, fan_out) in enumerate(dims, start=1):
        key, kw, kb = jax.random.split(key, 3)
        bound = 1.0 / jnp.sqrt(fan_in)
        params[f"w{idx}"] = jax.random.uniform(
            kw, (fan_in, fan_out), jnp.float32, minval=-bound, maxval=bound)
        params[f"b{idx}"] = jax.random.uniform(
            kb, (1, fan_out), jnp.float32, minval=-bound, maxval=bound)
    return params


def _reference_forward(x, params):
    """Pure-JAX f32 reference (eval-mode dropout)."""
    alpha = 0.2

    def elu(v):
        return jnp.where(v > 0, v, alpha * (jnp.exp(v) - 1.0))

    h = elu(x @ params["w1"] + params["b1"])
    h = elu(h @ params["w2"] + params["b2"])
    h = elu(h @ params["w3"] + params["b3"])
    return jax.nn.sigmoid(h @ params["w4"] + params["b4"])


if __name__ == "__main__":
    key = jax.random.PRNGKey(0)
    batch, data_dim, hidden_size = 8, 64, 32

    k_x, k_p = jax.random.split(key)
    x = jax.random.normal(k_x, (batch, data_dim), jnp.float32)
    params = init_params(k_p, data_dim, hidden_size)

    out = discriminator_mnist(x, params)
    out = jax.block_until_ready(out)
    ref = _reference_forward(x, params)
    assert out.shape == (batch, 1)
    # bf16 weights/activations with f32 accumulation -> loose tolerance vs f32 ref
    assert jnp.allclose(out, ref, atol=2e-2, rtol=2e-2), "mismatch vs reference"

    # Second check: batch not a multiple of the tile, grid length > 1.
    batch2 = 300
    x2 = jax.random.normal(jax.random.PRNGKey(1), (batch2, data_dim), jnp.float32)
    out2 = jax.block_until_ready(
        discriminator_mnist(x2, params, block_batch=128))
    ref2 = _reference_forward(x2, params)
    assert out2.shape == (batch2, 1)
    assert jnp.allclose(out2, ref2, atol=2e-2, rtol=2e-2), "mismatch vs reference (tiled)"

    print("KERNEL_OK")
</pallas_src>

<mosaic_0001>
module attributes {stable_mosaic.version = 11 : i64} {
  func.func @_discriminator_kernel(%arg0: i32, %arg1: memref<256x128xbf16, #tpu.memory_space<vmem>>, %arg2: memref<128x128xbf16, #tpu.memory_space<vmem>>, %arg3: memref<1x128xf32, #tpu.memory_space<vmem>>, %arg4: memref<128x128xbf16, #tpu.memory_space<vmem>>, %arg5: memref<1x128xf32, #tpu.memory_space<vmem>>, %arg6: memref<128x128xbf16, #tpu.memory_space<vmem>>, %arg7: memref<1x128xf32, #tpu.memory_space<vmem>>, %arg8: memref<1x128xbf16, #tpu.memory_space<vmem>>, %arg9: memref<1x1xf32, #tpu.memory_space<vmem>>, %arg10: memref<1x256xf32, #tpu.memory_space<vmem>>) attributes {dimension_semantics = [#tpu.dimension_semantics<parallel>], iteration_bounds = array<i64: 1>, scalar_prefetch = 0 : i64, scratch_operands = 0 : i64, tpu.core_type = #tpu.core_type<tc>, window_params = [{transform_indices = @transform_0, window_bounds = array<i64: 256, 128>}, {pipeline_mode = #tpu.pipeline_mode<synchronous>, transform_indices = @transform_1, window_bounds = array<i64: 128, 128>}, {pipeline_mode = #tpu.pipeline_mode<synchronous>, transform_indices = @transform_2, window_bounds = array<i64: 1, 128>}, {pipeline_mode = #tpu.pipeline_mode<synchronous>, transform_indices = @transform_3, window_bounds = array<i64: 128, 128>}, {pipeline_mode = #tpu.pipeline_mode<synchronous>, transform_indices = @transform_4, window_bounds = array<i64: 1, 128>}, {pipeline_mode = #tpu.pipeline_mode<synchronous>, transform_indices = @transform_5, window_bounds = array<i64: 128, 128>}, {pipeline_mode = #tpu.pipeline_mode<synchronous>, transform_indices = @transform_6, window_bounds = array<i64: 1, 128>}, {pipeline_mode = #tpu.pipeline_mode<synchronous>, transform_indices = @transform_7, window_bounds = array<i64: 1, 128>}, {pipeline_mode = #tpu.pipeline_mode<synchronous>, transform_indices = @transform_8, window_bounds = array<i64: 1, 1>}, {transform_indices = @transform_9, window_bounds = array<i64: 1, 256>}]} {
    %c0 = arith.constant 0 : index
    %c0_0 = arith.constant 0 : index
    %0 = vector.load %arg1[%c0, %c0_0] : memref<256x128xbf16, #tpu.memory_space<vmem>>, vector<256x128xbf16>
    %c0_1 = arith.constant 0 : index
    %c0_2 = arith.constant 0 : index
    %1 = vector.load %arg2[%c0_1, %c0_2] : memref<128x128xbf16, #tpu.memory_space<vmem>>, vector<128x128xbf16>
    %cst = arith.constant dense<0.000000e+00> : vector<256x128xf32>
    %2 = tpu.matmul %0, %1, %cst {dimension_numbers = #tpu.dot_dimension_numbers<[1], [0], [0], [1], [0, 0, 1, 1], [], []>} : vector<256x128xbf16>, vector<128x128xbf16>, vector<256x128xf32> -> vector<256x128xf32>
    %c0_3 = arith.constant 0 : index
    %c0_4 = arith.constant 0 : index
    %3 = vector.load %arg3[%c0_3, %c0_4] : memref<1x128xf32, #tpu.memory_space<vmem>>, vector<1x128xf32>
    %4 = vector.broadcast %3 : vector<1x128xf32> to vector<256x128xf32>
    %5 = arith.addf %2, %4 : vector<256x128xf32>
    %cst_5 = arith.constant 0.000000e+00 : f32
    %6 = vector.broadcast %cst_5 : f32 to vector<256x128xf32>
    %7 = arith.cmpf ogt, %5, %6 : vector<256x128xf32>
    %8 = math.exp %5 : vector<256x128xf32>
    %cst_6 = arith.constant 1.000000e+00 : f32
    %9 = vector.broadcast %cst_6 : f32 to vector<256x128xf32>
    %10 = arith.subf %8, %9 : vector<256x128xf32>
    %cst_7 = arith.constant 2.000000e-01 : f32
    %11 = vector.broadcast %cst_7 : f32 to vector<256x128xf32>
    %12 = arith.mulf %11, %10 : vector<256x128xf32>
    %13 = arith.select %7, %5, %12 : vector<256x128xi1>, vector<256x128xf32>
    %14 = arith.truncf %13 : vector<256x128xf32> to vector<256x128xbf16>
    %c0_8 = arith.constant 0 : index
    %c0_9 = arith.constant 0 : index
    %15 = vector.load %arg4[%c0_8, %c0_9] : memref<128x128xbf16, #tpu.memory_space<vmem>>, vector<128x128xbf16>
    %cst_10 = arith.constant dense<0.000000e+00> : vector<256x128xf32>
    %16 = tpu.matmul %14, %15, %cst_10 {dimension_numbers = #tpu.dot_dimension_numbers<[1], [0], [0], [1], [0, 0, 1, 1], [], []>} : vector<256x128xbf16>, vector<128x128xbf16>, vector<256x128xf32> -> vector<256x128xf32>
    %c0_11 = arith.constant 0 : index
    %c0_12 = arith.constant 0 : index
    %17 = vector.load %arg5[%c0_11, %c0_12] : memref<1x128xf32, #tpu.memory_space<vmem>>, vector<1x128xf32>
    %18 = vector.broadcast %17 : vector<1x128xf32> to vector<256x128xf32>
    %19 = arith.addf %16, %18 : vector<256x128xf32>
    %cst_13 = arith.constant 0.000000e+00 : f32
    %20 = vector.broadcast %cst_13 : f32 to vector<256x128xf32>
    %21 = arith.cmpf ogt, %19, %20 : vector<256x128xf32>
    %22 = math.exp %19 : vector<256x128xf32>
    %cst_14 = arith.constant 1.000000e+00 : f32
    %23 = vector.broadcast %cst_14 : f32 to vector<256x128xf32>
    %24 = arith.subf %22, %23 : vector<256x128xf32>
    %cst_15 = arith.constant 2.000000e-01 : f32
    %25 = vector.broadcast %cst_15 : f32 to vector<256x128xf32>
    %26 = arith.mulf %25, %24 : vector<256x128xf32>
    %27 = arith.select %21, %19, %26 : vector<256x128xi1>, vector<256x128xf32>
    %28 = arith.truncf %27 : vector<256x128xf32> to vector<256x128xbf16>
    %c0_16 = arith.constant 0 : index
    %c0_17 = arith.constant 0 : index
    %29 = vector.load %arg6[%c0_16, %c0_17] : memref<128x128xbf16, #tpu.memory_space<vmem>>, vector<128x128xbf16>
    %cst_18 = arith.constant dense<0.000000e+00> : vector<256x128xf32>
    %30 = tpu.matmul %28, %29, %cst_18 {dimension_numbers = #tpu.dot_dimension_numbers<[1], [0], [0], [1], [0, 0, 1, 1], [], []>} : vector<256x128xbf16>, vector<128x128xbf16>, vector<256x128xf32> -> vector<256x128xf32>
    %c0_19 = arith.constant 0 : index
    %c0_20 = arith.constant 0 : index
    %31 = vector.load %arg7[%c0_19, %c0_20] : memref<1x128xf32, #tpu.memory_space<vmem>>, vector<1x128xf32>
    %32 = vector.broadcast %31 : vector<1x128xf32> to vector<256x128xf32>
    %33 = arith.addf %30, %32 : vector<256x128xf32>
    %cst_21 = arith.constant 0.000000e+00 : f32
    %34 = vector.broadcast %cst_21 : f32 to vector<256x128xf32>
    %35 = arith.cmpf ogt, %33, %34 : vector<256x128xf32>
    %36 = math.exp %33 : vector<256x128xf32>
    %cst_22 = arith.constant 1.000000e+00 : f32
    %37 = vector.broadcast %cst_22 : f32 to vector<256x128xf32>
    %38 = arith.subf %36, %37 : vector<256x128xf32>
    %cst_23 = arith.constant 2.000000e-01 : f32
    %39 = vector.broadcast %cst_23 : f32 to vector<256x128xf32>
    %40 = arith.mulf %39, %38 : vector<256x128xf32>
    %41 = arith.select %35, %33, %40 : vector<256x128xi1>, vector<256x128xf32>
    %c0_24 = arith.constant 0 : index
    %c0_25 = arith.constant 0 : index
    %42 = vector.load %arg8[%c0_24, %c0_25] : memref<1x128xbf16, #tpu.memory_space<vmem>>, vector<1x128xbf16>
    %43 = arith.truncf %41 : vector<256x128xf32> to vector<256x128xbf16>
    %cst_26 = arith.constant dense<0.000000e+00> : vector<1x256xf32>
    %44 = tpu.matmul %42, %43, %cst_26 {dimension_numbers = #tpu.dot_dimension_numbers<[1], [1], [0], [0], [0, 0, 1, 0], [], []>} : vector<1x128xbf16>, vector<256x128xbf16>, vector<1x256xf32> -> vector<1x256xf32>
    %c0_27 = arith.constant 0 : index
    %c0_28 = arith.constant 0 : index
    %45 = vector.load %arg9[%c0_27, %c0_28] : memref<1x1xf32, #tpu.memory_space<vmem>>, vector<1x1xf32>
    %46 = vector.broadcast %45 : vector<1x1xf32> to vector<1x256xf32>
    %47 = arith.addf %44, %46 : vector<1x256xf32>
    %48 = arith.negf %47 : vector<1x256xf32>
    %49 = math.exp %48 : vector<1x256xf32>
    %cst_29 = arith.constant 1.000000e+00 : f32
    %50 = vector.broadcast %cst_29 : f32 to vector<1x256xf32>
    %51 = arith.addf %50, %49 : vector<1x256xf32>
    %52 = arith.divf %50, %51 : vector<1x256xf32>
    %c0_30 = arith.constant 0 : index
    %c0_31 = arith.constant 0 : index
    %53 = vector.load %arg10[%c0_30, %c0_31] : memref<1x256xf32, #tpu.memory_space<vmem>>, vector<1x256xf32>
    tpu.vector_store %arg10[%c0_30, %c0_31], %52 {strides = array<i32>} : memref<1x256xf32, #tpu.memory_space<vmem>>, vector<1x256xf32>,
    return
  }
  func.func @transform_0(%arg0: i32) -> (i32, i32) {
    %c0_i32 = arith.constant 0 : i32
    %c0_i32_0 = arith.constant 0 : i32
    return %arg0, %c0_i32 : i32, i32
  }
  func.func @transform_1(%arg0: i32) -> (i32, i32) {
    %c0_i32 = arith.constant 0 : i32
    %c0_i32_0 = arith.constant 0 : i32
    %c0_i32_1 = arith.constant 0 : i32
    return %c0_i32, %c0_i32_0 : i32, i32
  }
  func.func @transform_2(%arg0: i32) -> (i32, i32) {
    %c0_i32 = arith.constant 0 : i32
    %c0_i32_0 = arith.constant 0 : i32
    %c0_i32_1 = arith.constant 0 : i32
    return %c0_i32, %c0_i32_0 : i32, i32
  }
  func.func @transform_3(%arg0: i32) -> (i32, i32) {
    %c0_i32 = arith.constant 0 : i32
    %c0_i32_0 = arith.constant 0 : i32
    %c0_i32_1 = arith.constant 0 : i32
    return %c0_i32, %c0_i32_0 : i32, i32
  }
  func.func @transform_4(%arg0: i32) -> (i32, i32) {
    %c0_i32 = arith.constant 0 : i32
    %c0_i32_0 = arith.constant 0 : i32
    %c0_i32_1 = arith.constant 0 : i32
    return %c0_i32, %c0_i32_0 : i32, i32
  }
  func.func @transform_5(%arg0: i32) -> (i32, i32) {
    %c0_i32 = arith.constant 0 : i32
    %c0_i32_0 = arith.constant 0 : i32
    %c0_i32_1 = arith.constant 0 : i32
    return %c0_i32, %c0_i32_0 : i32, i32
  }
  func.func @transform_6(%arg0: i32) -> (i32, i32) {
    %c0_i32 = arith.constant 0 : i32
    %c0_i32_0 = arith.constant 0 : i32
    %c0_i32_1 = arith.constant 0 : i32
    return %c0_i32, %c0_i32_0 : i32, i32
  }
  func.func @transform_7(%arg0: i32) -> (i32, i32) {
    %c0_i32 = arith.constant 0 : i32
    %c0_i32_0 = arith.constant 0 : i32
    %c0_i32_1 = arith.constant 0 : i32
    return %c0_i32, %c0_i32_0 : i32, i32
  }
  func.func @transform_8(%arg0: i32) -> (i32, i32) {
    %c0_i32 = arith.constant 0 : i32
    %c0_i32_0 = arith.constant 0 : i32
    %c0_i32_1 = arith.constant 0 : i32
    return %c0_i32, %c0_i32_0 : i32, i32
  }
  func.func @transform_9(%arg0: i32) -> (i32, i32) {
    %c0_i32 = arith.constant 0 : i32
    %c0_i32_0 = arith.constant 0 : i32
    return %arg0, %c0_i32 : i32, i32
  }
}

</mosaic_0001>

<llo_original>
// kernel: tpu_custom_call.1
$region0: #{tpu_custom_call.1}
  #allocation0 [shape = 'u32[]', space=smem, size = 0x4, offset = 0x4, fixed_abs, tag = 'smem constant byte address 0x4 - core index']
  #allocation1 [shape = 'u32[144,128]{1,0:T(1,128)}', space=vmem, size = 0x12000, scoped, tag = 'internal scratch']
  #allocation2 [shape = 'f32[1,1]{1,0:T(1,128)S(1)}', space=vmem, size = 0x200, scoped, tag = 'scoped memory for tpu_custom_call.1']
  %s0 = inlined_call_operand.hbm [shape: bf16[256,128], index: 0, kind: input, shape index: {}]
  %s1 = inlined_call_operand.hbm [shape: bf16[128,128], index: 1, kind: input, shape index: {}]
  %s2 = inlined_call_operand.vmem [shape: f32[1,128], index: 2, kind: input, shape index: {}]
  %s3 = inlined_call_operand.hbm [shape: bf16[128,128], index: 3, kind: input, shape index: {}]
  %s4 = inlined_call_operand.vmem [shape: f32[1,128], index: 4, kind: input, shape index: {}]
  %s5 = inlined_call_operand.hbm [shape: bf16[128,128], index: 5, kind: input, shape index: {}]
  %s6 = inlined_call_operand.vmem [shape: f32[1,128], index: 6, kind: input, shape index: {}]
  %s7 = inlined_call_operand.vmem [shape: bf16[1,128], index: 7, kind: input, shape index: {}]
  %s8 = inlined_call_operand.<no memory space> [shape: f32[1,1], index: 8, kind: input, shape index: {}]
  %s9 = inlined_call_operand.hbm [shape: f32[1,256], index: 9, kind: output, shape index: {}]
  %s10 = sld [smem:[#allocation0]]
  $region62: #{tpu_custom_call.1} parent=0
    _
  %s12 = ssub.s32 1, %s10
  %s13 = scalar_select 0, %s12, %s10
  %v14 = vstv %s8
  %15 = vst [vmem:[#allocation2] sm:$0x1] %v14
  $region1: #{tpu_custom_call.1} parent=0
    #allocation3 [shape = 'u8[65536]{0}', space=vmem, size = 0x10000, scoped, tag = 'input window, operand 0, single buffered']
    #allocation4 [shape = 's32[1]{0}', space=sflag, size = 0x4, scoped, tag = 'scoped memory for tpu_custom_call.1']
    #allocation5 [shape = 's32[1]{0}', space=sflag, size = 0x4, scoped, tag = 'scoped memory for tpu_custom_call.1']
    #allocation6 [shape = 'u8[32768]{0}', space=vmem, size = 0x8000, scoped, tag = 'input window, operand 1, single buffered']
    #allocation7 [shape = 's32[1]{0}', space=sflag, size = 0x4, scoped, tag = 'scoped memory for tpu_custom_call.1']
    #allocation8 [shape = 'u8[32768]{0}', space=vmem, size = 0x8000, scoped, tag = 'input window, operand 3, single buffered']
    #allocation9 [shape = 'u8[32768]{0}', space=vmem, size = 0x8000, scoped, tag = 'input window, operand 5, single buffered']
    #allocation10 [shape = 's32[1]{0}', space=sflag, size = 0x4, scoped, tag = 'scoped memory for tpu_custom_call.1']
    #allocation11 [shape = 'u8[1024]{0}', space=vmem, size = 0x400, scoped, tag = 'output window, operand 0, single buffered']
    %16 = vsyncpa [#allocation4], 0
    %17 = vsyncpa [#allocation7], 0
    %18 = vsyncpa [#allocation10], 0
    %19 = vsyncpa [#allocation5], 0
    // Predicated region
    $region2: #{tpu_custom_call.1} parent=1 // pred_check
      _
    $region3: #{tpu_custom_call.1} parent=1 // pred_check_branch
      %21 = sbr.rel (0) target = $region5
    $region4: #{tpu_custom_call.1} parent=1 // pred_region
      %s23 = ssub.s32 2048, 2048
      %24 = vsyncadd [#allocation4], %s23
      %s25 = sshll.u32 [#allocation3], 4
      %s26 = int_to_ptr.vmem [resolvable:$true] %s25
      %31 = dma.hbm_to_vmem [thread:$0]  %s0, 2048, %s26, [#allocation4], 64, 64, 4
    $region5: #{tpu_custom_call.1} parent=1 // pred_fallthru
      _
    // Predicated region
    $region6: #{tpu_custom_call.1} parent=1 // pred_check
      _
    $region7: #{tpu_custom_call.1} parent=1 // pred_check_branch
      %33 = sbr.rel (0) target = $region9
    $region8: #{tpu_custom_call.1} parent=1 // pred_region
      %s35 = ssub.s32 1024, 1024
      %36 = vsyncadd [#allocation7], %s35
      %s37 = sshll.u32 [#allocation6], 4
      %s38 = int_to_ptr.vmem [resolvable:$true] %s37
      %43 = dma.hbm_to_vmem [thread:$0]  %s1, 1024, %s38, [#allocation7], 64, 64, 4
    $region9: #{tpu_custom_call.1} parent=1 // pred_fallthru
      _
    // Predicated region
    $region10: #{tpu_custom_call.1} parent=1 // pred_check
      _
    $region11: #{tpu_custom_call.1} parent=1 // pred_check_branch
      %45 = sbr.rel (0) target = $region13
    $region12: #{tpu_custom_call.1} parent=1 // pred_region
      _
    $region13: #{tpu_custom_call.1} parent=1 // pred_fallthru
      _
    // Predicated region
    $region14: #{tpu_custom_call.1} parent=1 // pred_check
      _
    $region15: #{tpu_custom_call.1} parent=1 // pred_check_branch
      %47 = sbr.rel (0) target = $region17
    $region16: #{tpu_custom_call.1} parent=1 // pred_region
      %s49 = ssub.s32 1024, 1024
      %50 = vsyncadd [#allocation7], %s49
      %s51 = sshll.u32 [#allocation8], 4
      %s52 = int_to_ptr.vmem [resolvable:$true] %s51
      %57 = dma.hbm_to_vmem [thread:$0]  %s3, 1024, %s52, [#allocation7], 64, 64, 4
    $region17: #{tpu_custom_call.1} parent=1 // pred_fallthru
      _
    // Predicated region
    $region18: #{tpu_custom_call.1} parent=1 // pred_check
      _
    $region19: #{tpu_custom_call.1} parent=1 // pred_check_branch
      %59 = sbr.rel (0) target = $region21
    $region20: #{tpu_custom_call.1} parent=1 // pred_region
      _
    $region21: #{tpu_custom_call.1} parent=1 // pred_fallthru
      _
    // Predicated region
    $region22: #{tpu_custom_call.1} parent=1 // pred_check
      _
    $region23: #{tpu_custom_call.1} parent=1 // pred_check_branch
      %61 = sbr.rel (0) target = $region25
    $region24: #{tpu_custom_call.1} parent=1 // pred_region
      %s63 = ssub.s32 1024, 1024
      %64 = vsyncadd [#allocation10], %s63
      %s65 = sshll.u32 [#allocation9], 4
      %s66 = int_to_ptr.vmem [resolvable:$true] %s65
      %71 = dma.hbm_to_vmem [thread:$0]  %s5, 1024, %s66, [#allocation10], 64, 64, 4
    $region25: #{tpu_custom_call.1} parent=1 // pred_fallthru
      _
    // Predicated region
    $region26: #{tpu_custom_call.1} parent=1 // pred_check
      _
    $region27: #{tpu_custom_call.1} parent=1 // pred_check_branch
      %73 = sbr.rel (0) target = $region29
    $region28: #{tpu_custom_call.1} parent=1 // pred_region
      _
    $region29: #{tpu_custom_call.1} parent=1 // pred_fallthru
      _
    // Predicated region
    $region30: #{tpu_custom_call.1} parent=1 // pred_check
      _
    $region31: #{tpu_custom_call.1} parent=1 // pred_check_branch
      %75 = sbr.rel (0) target = $region33
    $region32: #{tpu_custom_call.1} parent=1 // pred_region
      _
    $region33: #{tpu_custom_call.1} parent=1 // pred_fallthru
      _
    // Predicated region
    $region34: #{tpu_custom_call.1} parent=1 // pred_check
      _
    $region35: #{tpu_custom_call.1} parent=1 // pred_check_branch
      %77 = sbr.rel (0) target = $region37
    $region36: #{tpu_custom_call.1} parent=1 // pred_region
      _
    $region37: #{tpu_custom_call.1} parent=1 // pred_fallthru
      _
    // Predicated region
    $region38: #{tpu_custom_call.1} parent=1 // pred_check
      _
    $region39: #{tpu_custom_call.1} parent=1 // pred_check_branch
      %79 = sbr.rel (0) target = $region41
    $region40: #{tpu_custom_call.1} parent=1 // pred_region
      %80 = dma.done [#allocation4], 2048
    $region41: #{tpu_custom_call.1} parent=1 // pred_fallthru
      _
    // Predicated region
    $region42: #{tpu_custom_call.1} parent=1 // pred_check
      _
    $region43: #{tpu_custom_call.1} parent=1 // pred_check_branch
      %82 = sbr.rel (0) target = $region45
    $region44: #{tpu_custom_call.1} parent=1 // pred_region
      %83 = dma.done [#allocation7], 1024
    $region45: #{tpu_custom_call.1} parent=1 // pred_fallthru
      _
    // Predicated region
    $region46: #{tpu_custom_call.1} parent=1 // pred_check
      _
    $region47: #{tpu_custom_call.1} parent=1 // pred_check_branch
      %85 = sbr.rel (0) target = $region49
    $region48: #{tpu_custom_call.1} parent=1 // pred_region
      %86 = dma.done [#allocation7], 1024
    $region49: #{tpu_custom_call.1} parent=1 // pred_fallthru
      _
    // Predicated region
    $region50: #{tpu_custom_call.1} parent=1 // pred_check
      _
    $region51: #{tpu_custom_call.1} parent=1 // pred_check_branch
      %88 = sbr.rel (0) target = $region53
    $region52: #{tpu_custom_call.1} parent=1 // pred_region
      %89 = dma.done [#allocation10], 1024
    $region53: #{tpu_custom_call.1} parent=1 // pred_fallthru
      _
    %v91 = vld [vmem:[#allocation3] sm:$0xf]
    %v92 = vld [vmem:[#allocation3 + $0x4] sm:$0xf]
    %v93 = vld [vmem:[#allocation3 + $0x8] sm:$0xf]
    %v94 = vld [vmem:[#allocation3 + $0xc] sm:$0xf]
    %v95 = vld [vmem:[#allocation3 + $0x10] sm:$0xf]
    %v96 = vld [vmem:[#allocation3 + $0x14] sm:$0xf]
    %v97 = vld [vmem:[#allocation3 + $0x18] sm:$0xf]
    %v98 = vld [vmem:[#allocation3 + $0x1c] sm:$0xf]
    %v99 = vld [vmem:[#allocation3 + $0x20] sm:$0xf]
    %v100 = vld [vmem:[#allocation3 + $0x24] sm:$0xf]
    %v101 = vld [vmem:[#allocation3 + $0x28] sm:$0xf]
    %v102 = vld [vmem:[#allocation3 + $0x2c] sm:$0xf]
    %v103 = vld [vmem:[#allocation3 + $0x30] sm:$0xf]
    %v104 = vld [vmem:[#allocation3 + $0x34] sm:$0xf]
    %v105 = vld [vmem:[#allocation3 + $0x38] sm:$0xf]
    %v106 = vld [vmem:[#allocation3 + $0x3c] sm:$0xf]
    %v107 = vld [vmem:[#allocation3 + $0x40] sm:$0xf]
    %v108 = vld [vmem:[#allocation3 + $0x44] sm:$0xf]
    %v109 = vld [vmem:[#allocation3 + $0x48] sm:$0xf]
    %v110 = vld [vmem:[#allocation3 + $0x4c] sm:$0xf]
    %v111 = vld [vmem:[#allocation3 + $0x50] sm:$0xf]
    %v112 = vld [vmem:[#allocation3 + $0x54] sm:$0xf]
    %v113 = vld [vmem:[#allocation3 + $0x58] sm:$0xf]
    %v114 = vld [vmem:[#allocation3 + $0x5c] sm:$0xf]
    %v115 = vld [vmem:[#allocation3 + $0x60] sm:$0xf]
    %v116 = vld [vmem:[#allocation3 + $0x64] sm:$0xf]
    %v117 = vld [vmem:[#allocation3 + $0x68] sm:$0xf]
    %v118 = vld [vmem:[#allocation3 + $0x6c] sm:$0xf]
    %v119 = vld [vmem:[#allocation3 + $0x70] sm:$0xf]
    %v120 = vld [vmem:[#allocation3 + $0x74] sm:$0xf]
    %v121 = vld [vmem:[#allocation3 + $0x78] sm:$0xf]
    %v122 = vld [vmem:[#allocation3 + $0x7c] sm:$0xf]
    %v123 = vld [vmem:[#allocation6] sm:$0xf]
    %v124 = vld [vmem:[#allocation6 + $0x4] sm:$0xf]
    %v125 = vld [vmem:[#allocation6 + $0x8] sm:$0xf]
    %v126 = vld [vmem:[#allocation6 + $0xc] sm:$0xf]
    %v127 = vld [vmem:[#allocation6 + $0x10] sm:$0xf]
    %v128 = vld [vmem:[#allocation6 + $0x14] sm:$0xf]
    %v129 = vld [vmem:[#allocation6 + $0x18] sm:$0xf]
    %v130 = vld [vmem:[#allocation6 + $0x1c] sm:$0xf]
    %v131 = vld [vmem:[#allocation6 + $0x20] sm:$0xf]
    %v132 = vld [vmem:[#allocation6 + $0x24] sm:$0xf]
    %v133 = vld [vmem:[#allocation6 + $0x28] sm:$0xf]
    %v134 = vld [vmem:[#allocation6 + $0x2c] sm:$0xf]
    %v135 = vld [vmem:[#allocation6 + $0x30] sm:$0xf]
    %v136 = vld [vmem:[#allocation6 + $0x34] sm:$0xf]
    %v137 = vld [vmem:[#allocation6 + $0x38] sm:$0xf]
    %v138 = vld [vmem:[#allocation6 + $0x3c] sm:$0xf]
    %v139 = vld [vmem:[%s2] sm:$0x1]
    %v141 = vlaneseq
    %v142 = vshrl.u32 %v141, 7
    %v143 = vsub.s32 0, %v142
    %v144 = vrot.slane %v139, %v143
    %v178 = vunpack.c.l.b16 %v91
    %v179 = vunpack.c.l.b16 %v92
    %v180 = vunpack.c.l.b16 %v93
    %v181 = vunpack.c.l.b16 %v94
    %v182 = vunpack.c.l.b16 %v95
    %v183 = vunpack.c.l.b16 %v96
    %v184 = vunpack.c.l.b16 %v97
    %v185 = vunpack.c.l.b16 %v98
    %v186 = vunpack.c.l.b16 %v99
    %v187 = vunpack.c.l.b16 %v100
    %v188 = vunpack.c.l.b16 %v101
    %v189 = vunpack.c.l.b16 %v102
    %v190 = vunpack.c.l.b16 %v103
    %v191 = vunpack.c.l.b16 %v104
    %v192 = vunpack.c.l.b16 %v105
    %v193 = vunpack.c.l.b16 %v106
    %v194 = vunpack.c.l.b16 %v107
    %v195 = vunpack.c.l.b16 %v108
    %v196 = vunpack.c.l.b16 %v109
    %v197 = vunpack.c.l.b16 %v110
    %v198 = vunpack.c.l.b16 %v111
    %v199 = vunpack.c.l.b16 %v112
    %v200 = vunpack.c.l.b16 %v113
    %v201 = vunpack.c.l.b16 %v114
    %v202 = vunpack.c.l.b16 %v115
    %v203 = vunpack.c.l.b16 %v116
    %v204 = vunpack.c.l.b16 %v117
    %v205 = vunpack.c.l.b16 %v118
    %v206 = vunpack.c.l.b16 %v119
    %v207 = vunpack.c.l.b16 %v120
    %v208 = vunpack.c.l.b16 %v121
    %v209 = vunpack.c.l.b16 %v122
    %v210 = vpack.c.b16 %v179, %v178
    %v211 = vpack.c.b16 %v181, %v180
    %v212 = vpack.c.b16 %v183, %v182
    %v213 = vpack.c.b16 %v185, %v184
    %v214 = vpack.c.b16 %v187, %v186
    %v215 = vpack.c.b16 %v189, %v188
    %v216 = vpack.c.b16 %v191, %v190
    %v217 = vpack.c.b16 %v193, %v192
    %v218 = vpack.c.b16 %v195, %v194
    %v219 = vpack.c.b16 %v197, %v196
    %v220 = vpack.c.b16 %v199, %v198
    %v221 = vpack.c.b16 %v201, %v200
    %v222 = vpack.c.b16 %v203, %v202
    %v223 = vpack.c.b16 %v205, %v204
    %v224 = vpack.c.b16 %v207, %v206
    %v225 = vpack.c.b16 %v209, %v208
    %v258 = vunpack.c.l.b16 %v123
    %v259 = vunpack.c.l.b16 %v124
    %v260 = vunpack.c.l.b16 %v125
    %v261 = vunpack.c.l.b16 %v126
    %v262 = vunpack.c.l.b16 %v127
    %v263 = vunpack.c.l.b16 %v128
    %v264 = vunpack.c.l.b16 %v129
    %v265 = vunpack.c.l.b16 %v130
    %v266 = vunpack.c.l.b16 %v131
    %v267 = vunpack.c.l.b16 %v132
    %v268 = vunpack.c.l.b16 %v133
    %v269 = vunpack.c.l.b16 %v134
    %v270 = vunpack.c.l.b16 %v135
    %v271 = vunpack.c.l.b16 %v136
    %v272 = vunpack.c.l.b16 %v137
    %v273 = vunpack.c.l.b16 %v138
    %v274 = vpack.c.b16 %v259, %v258
    %v275 = vpack.c.b16 %v261, %v260
    %v276 = vpack.c.b16 %v263, %v262
    %v277 = vpack.c.b16 %v265, %v264
    %v278 = vpack.c.b16 %v267, %v266
    %v279 = vpack.c.b16 %v269, %v268
    %v280 = vpack.c.b16 %v271, %v270
    %v281 = vpack.c.b16 %v273, %v272
    %290 = vmatprep.subr.bf16.mxu0 0
    %291 = vmatpush1.bf16.msra.mxu0 %v274
    %292 = vmatprep.subr.bf16.mxu0 0
    %293 = vmatpush1.bf16.msra.mxu0 %v275
    %294 = vmatprep.subr.bf16.mxu0 0
    %295 = vmatpush1.bf16.msra.mxu0 %v276
    %296 = vmatprep.subr.bf16.mxu0 0
    %297 = vmatpush1.bf16.msra.mxu0 %v277
    %298 = vmatprep.subr.bf16.mxu0 0
    %299 = vmatpush1.bf16.msra.mxu0 %v278
    %300 = vmatprep.subr.bf16.mxu0 0
    %301 = vmatpush1.bf16.msra.mxu0 %v279
    %302 = vmatprep.subr.bf16.mxu0 0
    %303 = vmatpush1.bf16.msra.mxu0 %v280
    %304 = vmatprep.subr.bf16.mxu0 0
    %305 = vmatpush1.bf16.msra.mxu0 %v281
    %306 = vmatprep.subr.bf16.mxu0 0
    %307 = vmatpush1.bf16.msra.mxu0 0
    %308 = vmatprep.subr.bf16.mxu0 0
    %309 = vmatpush1.bf16.msra.mxu0 0
    %310 = vmatprep.subr.bf16.mxu0 0
    %311 = vmatpush1.bf16.msra.mxu0 0
    %312 = vmatprep.subr.bf16.mxu0 0
    %313 = vmatpush1.bf16.msra.mxu0 0
    %314 = vmatprep.subr.bf16.mxu0 0
    %315 = vmatpush1.bf16.msra.mxu0 0
    %316 = vmatprep.subr.bf16.mxu0 0
    %317 = vmatpush1.bf16.msra.mxu0 0
    %318 = vmatprep.subr.bf16.mxu0 0
    %319 = vmatpush1.bf16.msra.mxu0 0
    %320 = vmatprep.subr.bf16.mxu0 0
    %321 = vmatpush1.bf16.msra.mxu0 0
    %322 = vmatprep.mubr.bf16.mxu0 0
    %323 = vmatmul.mubr.bf16.gmra.mrb[0].mxu0 %v210
    %v324 = vpop.f32.mrb[0].mxu0
    %v325 = vadd.f32 %v144, %v324
    %v326 = vpop.f32.mrb[0].mxu0
    %v327 = vpop.f32.mrb[0].mxu0
    %v328 = vadd.f32 %v144, %v327
    %v329 = vpop.f32.mrb[0].mxu0
    %330 = vmatprep.mubr.bf16.mxu0 0
    %331 = vmatmul.mubr.bf16.gmra.mrb[0].mxu0 %v211
    %v332 = vpop.f32.mrb[0].mxu0
    %v333 = vadd.f32 %v144, %v332
    %v334 = vpop.f32.mrb[0].mxu0
    %v335 = vpop.f32.mrb[0].mxu0
    %v336 = vadd.f32 %v144, %v335
    %v337 = vpop.f32.mrb[0].mxu0
    %338 = vmatprep.mubr.bf16.mxu0 0
    %339 = vmatmul.mubr.bf16.gmra.mrb[0].mxu0 %v212
    %v340 = vpop.f32.mrb[0].mxu0
    %v341 = vadd.f32 %v144, %v340
    %v342 = vpop.f32.mrb[0].mxu0
    %v343 = vpop.f32.mrb[0].mxu0
    %v344 = vadd.f32 %v144, %v343
    %v345 = vpop.f32.mrb[0].mxu0
    %346 = vmatprep.mubr.bf16.mxu0 0
    %347 = vmatmul.mubr.bf16.gmra.mrb[0].mxu0 %v213
    %v348 = vpop.f32.mrb[0].mxu0
    %v349 = vadd.f32 %v144, %v348
    %v350 = vpop.f32.mrb[0].mxu0
    %v351 = vpop.f32.mrb[0].mxu0
    %v352 = vadd.f32 %v144, %v351
    %v353 = vpop.f32.mrb[0].mxu0
    %354 = vmatprep.mubr.bf16.mxu0 0
    %355 = vmatmul.mubr.bf16.gmra.mrb[0].mxu0 %v214
    %v356 = vpop.f32.mrb[0].mxu0
    %v357 = vadd.f32 %v144, %v356
    %v358 = vpop.f32.mrb[0].mxu0
    %v359 = vpop.f32.mrb[0].mxu0
    %v360 = vadd.f32 %v144, %v359
    %v361 = vpop.f32.mrb[0].mxu0
    %362 = vmatprep.mubr.bf16.mxu0 0
    %363 = vmatmul.mubr.bf16.gmra.mrb[0].mxu0 %v215
    %v364 = vpop.f32.mrb[0].mxu0
    %v365 = vadd.f32 %v144, %v364
    %v366 = vpop.f32.mrb[0].mxu0
    %v367 = vpop.f32.mrb[0].mxu0
    %v368 = vadd.f32 %v144, %v367
    %v369 = vpop.f32.mrb[0].mxu0
    %370 = vmatprep.mubr.bf16.mxu0 0
    %371 = vmatmul.mubr.bf16.gmra.mrb[0].mxu0 %v216
    %v372 = vpop.f32.mrb[0].mxu0
    %v373 = vadd.f32 %v144, %v372
    %v374 = vpop.f32.mrb[0].mxu0
    %v375 = vpop.f32.mrb[0].mxu0
    %v376 = vadd.f32 %v144, %v375
    %v377 = vpop.f32.mrb[0].mxu0
    %378 = vmatprep.mubr.bf16.mxu0 0
    %379 = vmatmul.mubr.bf16.gmra.mrb[0].mxu0 %v217
    %v380 = vpop.f32.mrb[0].mxu0
    %v381 = vadd.f32 %v144, %v380
    %v382 = vpop.f32.mrb[0].mxu0
    %v383 = vpop.f32.mrb[0].mxu0
    %v384 = vadd.f32 %v144, %v383
    %v385 = vpop.f32.mrb[0].mxu0
    %386 = vmatprep.mubr.bf16.mxu0 0
    %387 = vmatmul.mubr.bf16.gmra.mrb[0].mxu0 %v218
    %v388 = vpop.f32.mrb[0].mxu0
    %v389 = vadd.f32 %v144, %v388
    %v390 = vpop.f32.mrb[0].mxu0
    %v391 = vpop.f32.mrb[0].mxu0
    %v392 = vadd.f32 %v144, %v391
    %v393 = vpop.f32.mrb[0].mxu0
    %394 = vmatprep.mubr.bf16.mxu0 0
    %395 = vmatmul.mubr.bf16.gmra.mrb[0].mxu0 %v219
    %v396 = vpop.f32.mrb[0].mxu0
    %v397 = vadd.f32 %v144, %v396
    %v398 = vpop.f32.mrb[0].mxu0
    %v399 = vpop.f32.mrb[0].mxu0
    %v400 = vadd.f32 %v144, %v399
    %v401 = vpop.f32.mrb[0].mxu0
    %402 = vmatprep.mubr.bf16.mxu0 0
    %403 = vmatmul.mubr.bf16.gmra.mrb[0].mxu0 %v220
    %v404 = vpop.f32.mrb[0].mxu0
    %v405 = vadd.f32 %v144, %v404
    %v406 = vpop.f32.mrb[0].mxu0
    %v407 = vpop.f32.mrb[0].mxu0
    %v408 = vadd.f32 %v144, %v407
    %v409 = vpop.f32.mrb[0].mxu0
    %410 = vmatprep.mubr.bf16.mxu0 0
    %411 = vmatmul.mubr.bf16.gmra.mrb[0].mxu0 %v221
    %v412 = vpop.f32.mrb[0].mxu0
    %v413 = vadd.f32 %v144, %v412
    %v414 = vpop.f32.mrb[0].mxu0
    %v415 = vpop.f32.mrb[0].mxu0
    %v416 = vadd.f32 %v144, %v415
    %v417 = vpop.f32.mrb[0].mxu0
    %418 = vmatprep.mubr.bf16.mxu0 0
    %419 = vmatmul.mubr.bf16.gmra.mrb[0].mxu0 %v222
    %v420 = vpop.f32.mrb[0].mxu0
    %v421 = vadd.f32 %v144, %v420
    %v422 = vpop.f32.mrb[0].mxu0
    %v423 = vpop.f32.mrb[0].mxu0
    %v424 = vadd.f32 %v144, %v423
    %v425 = vpop.f32.mrb[0].mxu0
    %426 = vmatprep.mubr.bf16.mxu0 0
    %427 = vmatmul.mubr.bf16.gmra.mrb[0].mxu0 %v223
    %v428 = vpop.f32.mrb[0].mxu0
    %v429 = vadd.f32 %v144, %v428
    %v430 = vpop.f32.mrb[0].mxu0
    %v431 = vpop.f32.mrb[0].mxu0
    %v432 = vadd.f32 %v144, %v431
    %v433 = vpop.f32.mrb[0].mxu0
    %434 = vmatprep.mubr.bf16.mxu0 0
    %435 = vmatmul.mubr.bf16.gmra.mrb[0].mxu0 %v224
    %v436 = vpop.f32.mrb[0].mxu0
    %v437 = vadd.f32 %v144, %v436
    %v438 = vpop.f32.mrb[0].mxu0
    %v439 = vpop.f32.mrb[0].mxu0
    %v440 = vadd.f32 %v144, %v439
    %v441 = vpop.f32.mrb[0].mxu0
    %442 = vmatprep.mubr.bf16.mxu0 0
    %443 = vmatmul.mubr.bf16.gmra.mrb[0].mxu0 %v225
    %v444 = vpop.f32.mrb[0].mxu0
    %v445 = vadd.f32 %v144, %v444
    %v446 = vpop.f32.mrb[0].mxu0
    %v447 = vpop.f32.mrb[0].mxu0
    %v448 = vadd.f32 %v144, %v447
    %v449 = vpop.f32.mrb[0].mxu0
    %450 = vdwg.mxu0
    %vm451 = vcmp.gt.f32.partialorder %v325, 0.0
    %vm452 = vcmp.gt.f32.partialorder %v328, 0.0
    %vm453 = vcmp.gt.f32.partialorder %v333, 0.0
    %vm454 = vcmp.gt.f32.partialorder %v336, 0.0
    %vm455 = vcmp.gt.f32.partialorder %v341, 0.0
    %vm456 = vcmp.gt.f32.partialorder %v344, 0.0
    %vm457 = vcmp.gt.f32.partialorder %v349, 0.0
    %vm458 = vcmp.gt.f32.partialorder %v352, 0.0
    %vm459 = vcmp.gt.f32.partialorder %v357, 0.0
    %vm460 = vcmp.gt.f32.partialorder %v360, 0.0
    %vm461 = vcmp.gt.f32.partialorder %v365, 0.0
    %vm462 = vcmp.gt.f32.partialorder %v368, 0.0
    %vm463 = vcmp.gt.f32.partialorder %v373, 0.0
    %vm464 = vcmp.gt.f32.partialorder %v376, 0.0
    %vm465 = vcmp.gt.f32.partialorder %v381, 0.0
    %vm466 = vcmp.gt.f32.partialorder %v384, 0.0
    %vm467 = vcmp.gt.f32.partialorder %v389, 0.0
    %vm468 = vcmp.gt.f32.partialorder %v392, 0.0
    %vm469 = vcmp.gt.f32.partialorder %v397, 0.0
    %vm470 = vcmp.gt.f32.partialorder %v400, 0.0
    %vm471 = vcmp.gt.f32.partialorder %v405, 0.0
    %vm472 = vcmp.gt.f32.partialorder %v408, 0.0
    %vm473 = vcmp.gt.f32.partialorder %v413, 0.0
    %vm474 = vcmp.gt.f32.partialorder %v416, 0.0
    %vm475 = vcmp.gt.f32.partialorder %v421, 0.0
    %vm476 = vcmp.gt.f32.partialorder %v424, 0.0
    %vm477 = vcmp.gt.f32.partialorder %v429, 0.0
    %vm478 = vcmp.gt.f32.partialorder %v432, 0.0
    %vm479 = vcmp.gt.f32.partialorder %v437, 0.0
    %vm480 = vcmp.gt.f32.partialorder %v440, 0.0
    %vm481 = vcmp.gt.f32.partialorder %v445, 0.0
    %vm482 = vcmp.gt.f32.partialorder %v448, 0.0
    %v483 = vmul.f32 %v325, 1.442695
    %v484 = vpow.pop %v483
    %v485 = vmul.f32 %v328, 1.442695
    %v486 = vpow.pop %v485
    %v487 = vmul.f32 %v333, 1.442695
    %v488 = vpow.pop %v487
    %v489 = vmul.f32 %v336, 1.442695
    %v490 = vpow.pop %v489
    %v491 = vmul.f32 %v341, 1.442695
    %v492 = vpow.pop %v491
    %v493 = vmul.f32 %v344, 1.442695
    %v494 = vpow.pop %v493
    %v495 = vmul.f32 %v349, 1.442695
    %v496 = vpow.pop %v495
    %v497 = vmul.f32 %v352, 1.442695
    %v498 = vpow.pop %v497
    %v499 = vmul.f32 %v357, 1.442695
    %v500 = vpow.pop %v499
    %v501 = vmul.f32 %v360, 1.442695
    %v502 = vpow.pop %v501
    %v503 = vmul.f32 %v365, 1.442695
    %v504 = vpow.pop %v503
    %v505 = vmul.f32 %v368, 1.442695
    %v506 = vpow.pop %v505
    %v507 = vmul.f32 %v373, 1.442695
    %v508 = vpow.pop %v507
    %v509 = vmul.f32 %v376, 1.442695
    %v510 = vpow.pop %v509
    %v511 = vmul.f32 %v381, 1.442695
    %v512 = vpow.pop %v511
    %v513 = vmul.f32 %v384, 1.442695
    %v514 = vpow.pop %v513
    %v515 = vmul.f32 %v389, 1.442695
    %v516 = vpow.pop %v515
    %v517 = vmul.f32 %v392, 1.442695
    %v518 = vpow.pop %v517
    %v519 = vmul.f32 %v397, 1.442695
    %v520 = vpow.pop %v519
    %v521 = vmul.f32 %v400, 1.442695
    %v522 = vpow.pop %v521
    %v523 = vmul.f32 %v405, 1.442695
    %v524 = vpow.pop %v523
    %v525 = vmul.f32 %v408, 1.442695
    %v526 = vpow.pop %v525
    %v527 = vmul.f32 %v413, 1.442695
    %v528 = vpow.pop %v527
    %v529 = vmul.f32 %v416, 1.442695
    %v530 = vpow.pop %v529
    %v531 = vmul.f32 %v421, 1.442695
    %v532 = vpow.pop %v531
    %v533 = vmul.f32 %v424, 1.442695
    %v534 = vpow.pop %v533
    %v535 = vmul.f32 %v429, 1.442695
    %v536 = vpow.pop %v535
    %v537 = vmul.f32 %v432, 1.442695
    %v538 = vpow.pop %v537
    %v539 = vmul.f32 %v437, 1.442695
    %v540 = vpow.pop %v539
    %v541 = vmul.f32 %v440, 1.442695
    %v542 = vpow.pop %v541
    %v543 = vmul.f32 %v445, 1.442695
    %v544 = vpow.pop %v543
    %v545 = vmul.f32 %v448, 1.442695
    %v546 = vpow.pop %v545
    %v547 = vsub.f32 %v484, 1.0
    %v548 = vsub.f32 %v486, 1.0
    %v549 = vsub.f32 %v488, 1.0
    %v550 = vsub.f32 %v490, 1.0
    %v551 = vsub.f32 %v492, 1.0
    %v552 = vsub.f32 %v494, 1.0
    %v553 = vsub.f32 %v496, 1.0
    %v554 = vsub.f32 %v498, 1.0
    %v555 = vsub.f32 %v500, 1.0
    %v556 = vsub.f32 %v502, 1.0
    %v557 = vsub.f32 %v504, 1.0
    %v558 = vsub.f32 %v506, 1.0
    %v559 = vsub.f32 %v508, 1.0
    %v560 = vsub.f32 %v510, 1.0
    %v561 = vsub.f32 %v512, 1.0
    %v562 = vsub.f32 %v514, 1.0
    %v563 = vsub.f32 %v516, 1.0
    %v564 = vsub.f32 %v518, 1.0
    %v565 = vsub.f32 %v520, 1.0
    %v566 = vsub.f32 %v522, 1.0
    %v567 = vsub.f32 %v524, 1.0
    %v568 = vsub.f32 %v526, 1.0
    %v569 = vsub.f32 %v528, 1.0
    %v570 = vsub.f32 %v530, 1.0
    %v571 = vsub.f32 %v532, 1.0
    %v572 = vsub.f32 %v534, 1.0
    %v573 = vsub.f32 %v536, 1.0
    %v574 = vsub.f32 %v538, 1.0
    %v575 = vsub.f32 %v540, 1.0
    %v576 = vsub.f32 %v542, 1.0
    %v577 = vsub.f32 %v544, 1.0
    %v578 = vsub.f32 %v546, 1.0
    %v579 = vmul.f32 %v547, 0.2
    %v580 = vmul.f32 %v548, 0.2
    %v581 = vmul.f32 %v549, 0.2
    %v582 = vmul.f32 %v550, 0.2
    %v583 = vmul.f32 %v551, 0.2
    %v584 = vmul.f32 %v552, 0.2
    %v585 = vmul.f32 %v553, 0.2
    %v586 = vmul.f32 %v554, 0.2
    %v587 = vmul.f32 %v555, 0.2
    %v588 = vmul.f32 %v556, 0.2
    %v589 = vmul.f32 %v557, 0.2
    %v590 = vmul.f32 %v558, 0.2
    %v591 = vmul.f32 %v559, 0.2
    %v592 = vmul.f32 %v560, 0.2
    %v593 = vmul.f32 %v561, 0.2
    %v594 = vmul.f32 %v562, 0.2
    %v595 = vmul.f32 %v563, 0.2
    %v596 = vmul.f32 %v564, 0.2
    %v597 = vmul.f32 %v565, 0.2
    %v598 = vmul.f32 %v566, 0.2
    %v599 = vmul.f32 %v567, 0.2
    %v600 = vmul.f32 %v568, 0.2
    %v601 = vmul.f32 %v569, 0.2
    %v602 = vmul.f32 %v570, 0.2
    %v603 = vmul.f32 %v571, 0.2
    %v604 = vmul.f32 %v572, 0.2
    %v605 = vmul.f32 %v573, 0.2
    %v606 = vmul.f32 %v574, 0.2
    %v607 = vmul.f32 %v575, 0.2
    %v608 = vmul.f32 %v576, 0.2
    %v609 = vmul.f32 %v577, 0.2
    %v610 = vmul.f32 %v578, 0.2
    %v611 = vsel %vm451, %v325, %v579
    %v612 = vsel %vm452, %v328, %v580
    %v613 = vsel %vm453, %v333, %v581
    %v614 = vsel %vm454, %v336, %v582
    %v615 = vsel %vm455, %v341, %v583
    %v616 = vsel %vm456, %v344, %v584
    %v617 = vsel %vm457, %v349, %v585
    %v618 = vsel %vm458, %v352, %v586
    %v619 = vsel %vm459, %v357, %v587
    %v620 = vsel %vm460, %v360, %v588
    %v621 = vsel %vm461, %v365, %v589
    %v622 = vsel %vm462, %v368, %v590
    %v623 = vsel %vm463, %v373, %v591
    %v624 = vsel %vm464, %v376, %v592
    %v625 = vsel %vm465, %v381, %v593
    %v626 = vsel %vm466, %v384, %v594
    %v627 = vsel %vm467, %v389, %v595
    %v628 = vsel %vm468, %v392, %v596
    %v629 = vsel %vm469, %v397, %v597
    %v630 = vsel %vm470, %v400, %v598
    %v631 = vsel %vm471, %v405, %v599
    %v632 = vsel %vm472, %v408, %v600
    %v633 = vsel %vm473, %v413, %v601
    %v634 = vsel %vm474, %v416, %v602
    %v635 = vsel %vm475, %v421, %v603
    %v636 = vsel %vm476, %v424, %v604
    %v637 = vsel %vm477, %v429, %v605
    %v638 = vsel %vm478, %v432, %v606
    %v639 = vsel %vm479, %v437, %v607
    %v640 = vsel %vm480, %v440, %v608
    %v641 = vsel %vm481, %v445, %v609
    %v642 = vsel %vm482, %v448, %v610
    %v643 = vpack.c.bf16 %v612, %v611
    %v644 = vpack.c.bf16 %v614, %v613
    %v645 = vpack.c.bf16 %v616, %v615
    %v646 = vpack.c.bf16 %v618, %v617
    %v647 = vpack.c.bf16 %v620, %v619
    %v648 = vpack.c.bf16 %v622, %v621
    %v649 = vpack.c.bf16 %v624, %v623
    %v650 = vpack.c.bf16 %v626, %v625
    %v651 = vpack.c.bf16 %v628, %v627
    %v652 = vpack.c.bf16 %v630, %v629
    %v653 = vpack.c.bf16 %v632, %v631
    %v654 = vpack.c.bf16 %v634, %v633
    %v655 = vpack.c.bf16 %v636, %v635
    %v656 = vpack.c.bf16 %v638, %v637
    %v657 = vpack.c.bf16 %v640, %v639
    %v658 = vpack.c.bf16 %v642, %v641
    %v659 = vld [vmem:[#allocation8] sm:$0xf]
    %v660 = vld [vmem:[#allocation8 + $0x4] sm:$0xf]
    %v661 = vld [vmem:[#allocation8 + $0x8] sm:$0xf]
    %v662 = vld [vmem:[#allocation8 + $0xc] sm:$0xf]
    %v663 = vld [vmem:[#allocation8 + $0x10] sm:$0xf]
    %v664 = vld [vmem:[#allocation8 + $0x14] sm:$0xf]
    %v665 = vld [vmem:[#allocation8 + $0x18] sm:$0xf]
    %v666 = vld [vmem:[#allocation8 + $0x1c] sm:$0xf]
    %v667 = vld [vmem:[#allocation8 + $0x20] sm:$0xf]
    %v668 = vld [vmem:[#allocation8 + $0x24] sm:$0xf]
    %v669 = vld [vmem:[#allocation8 + $0x28] sm:$0xf]
    %v670 = vld [vmem:[#allocation8 + $0x2c] sm:$0xf]
    %v671 = vld [vmem:[#allocation8 + $0x30] sm:$0xf]
    %v672 = vld [vmem:[#allocation8 + $0x34] sm:$0xf]
    %v673 = vld [vmem:[#allocation8 + $0x38] sm:$0xf]
    %v674 = vld [vmem:[#allocation8 + $0x3c] sm:$0xf]
    %v675 = vld [vmem:[%s4] sm:$0x1]
    %v677 = vlaneseq
    %v678 = vshrl.u32 %v677, 7
    %v679 = vsub.s32 0, %v678
    %v680 = vrot.slane %v675, %v679
    %v698 = vunpack.c.l.b16 %v659
    %v699 = vunpack.c.l.b16 %v660
    %v700 = vunpack.c.l.b16 %v661
    %v701 = vunpack.c.l.b16 %v662
    %v702 = vunpack.c.l.b16 %v663
    %v703 = vunpack.c.l.b16 %v664
    %v704 = vunpack.c.l.b16 %v665
    %v705 = vunpack.c.l.b16 %v666
    %v706 = vunpack.c.l.b16 %v667
    %v707 = vunpack.c.l.b16 %v668
    %v708 = vunpack.c.l.b16 %v669
    %v709 = vunpack.c.l.b16 %v670
    %v710 = vunpack.c.l.b16 %v671
    %v711 = vunpack.c.l.b16 %v672
    %v712 = vunpack.c.l.b16 %v673
    %v713 = vunpack.c.l.b16 %v674
    %v714 = vpack.c.b16 %v699, %v698
    %v715 = vpack.c.b16 %v701, %v700
    %v716 = vpack.c.b16 %v703, %v702
    %v717 = vpack.c.b16 %v705, %v704
    %v718 = vpack.c.b16 %v707, %v706
    %v719 = vpack.c.b16 %v709, %v708
    %v720 = vpack.c.b16 %v711, %v710
    %v721 = vpack.c.b16 %v713, %v712
    %730 = vmatprep.subr.bf16.mxu0 0
    %731 = vmatpush1.bf16.msra.mxu0 %v714
    %732 = vmatprep.subr.bf16.mxu0 0
    %733 = vmatpush1.bf16.msra.mxu0 %v715
    %734 = vmatprep.subr.bf16.mxu0 0
    %735 = vmatpush1.bf16.msra.mxu0 %v716
    %736 = vmatprep.subr.bf16.mxu0 0
    %737 = vmatpush1.bf16.msra.mxu0 %v717
    %738 = vmatprep.subr.bf16.mxu0 0
    %739 = vmatpush1.bf16.msra.mxu0 %v718
    %740 = vmatprep.subr.bf16.mxu0 0
    %741 = vmatpush1.bf16.msra.mxu0 %v719
    %742 = vmatprep.subr.bf16.mxu0 0
    %743 = vmatpush1.bf16.msra.mxu0 %v720
    %744 = vmatprep.subr.bf16.mxu0 0
    %745 = vmatpush1.bf16.msra.mxu0 %v721
    %746 = vmatprep.subr.bf16.mxu0 0
    %747 = vmatpush1.bf16.msra.mxu0 0
    %748 = vmatprep.subr.bf16.mxu0 0
    %749 = vmatpush1.bf16.msra.mxu0 0
    %750 = vmatprep.subr.bf16.mxu0 0
    %751 = vmatpush1.bf16.msra.mxu0 0
    %752 = vmatprep.subr.bf16.mxu0 0
    %753 = vmatpush1.bf16.msra.mxu0 0
    %754 = vmatprep.subr.bf16.mxu0 0
    %755 = vmatpush1.bf16.msra.mxu0 0
    %756 = vmatprep.subr.bf16.mxu0 0
    %757 = vmatpush1.bf16.msra.mxu0 0
    %758 = vmatprep.subr.bf16.mxu0 0
    %759 = vmatpush1.bf16.msra.mxu0 0
    %760 = vmatprep.subr.bf16.mxu0 0
    %761 = vmatpush1.bf16.msra.mxu0 0
    %762 = vmatprep.mubr.bf16.mxu0 0
    %763 = vmatmul.mubr.bf16.gmra.mrb[0].mxu0 %v643
    %v764 = vpop.f32.mrb[0].mxu0
    %v765 = vadd.f32 %v680, %v764
    %v766 = vpop.f32.mrb[0].mxu0
    %v767 = vpop.f32.mrb[0].mxu0
    %v768 = vadd.f32 %v680, %v767
    %v769 = vpop.f32.mrb[0].mxu0
    %770 = vmatprep.mubr.bf16.mxu0 0
    %771 = vmatmul.mubr.bf16.gmra.mrb[0].mxu0 %v644
    %v772 = vpop.f32.mrb[0].mxu0
    %v773 = vadd.f32 %v680, %v772
    %v774 = vpop.f32.mrb[0].mxu0
    %v775 = vpop.f32.mrb[0].mxu0
    %v776 = vadd.f32 %v680, %v775
    %v777 = vpop.f32.mrb[0].mxu0
    %778 = vmatprep.mubr.bf16.mxu0 0
    %779 = vmatmul.mubr.bf16.gmra.mrb[0].mxu0 %v645
    %v780 = vpop.f32.mrb[0].mxu0
    %v781 = vadd.f32 %v680, %v780
    %v782 = vpop.f32.mrb[0].mxu0
    %v783 = vpop.f32.mrb[0].mxu0
    %v784 = vadd.f32 %v680, %v783
    %v785 = vpop.f32.mrb[0].mxu0
    %786 = vmatprep.mubr.bf16.mxu0 0
    %787 = vmatmul.mubr.bf16.gmra.mrb[0].mxu0 %v646
    %v788 = vpop.f32.mrb[0].mxu0
    %v789 = vadd.f32 %v680, %v788
    %v790 = vpop.f32.mrb[0].mxu0
    %v791 = vpop.f32.mrb[0].mxu0
    %v792 = vadd.f32 %v680, %v791
    %v793 = vpop.f32.mrb[0].mxu0
    %794 = vmatprep.mubr.bf16.mxu0 0
    %795 = vmatmul.mubr.bf16.gmra.mrb[0].mxu0 %v647
    %v796 = vpop.f32.mrb[0].mxu0
    %v797 = vadd.f32 %v680, %v796
    %v798 = vpop.f32.mrb[0].mxu0
    %v799 = vpop.f32.mrb[0].mxu0
    %v800 = vadd.f32 %v680, %v799
    %v801 = vpop.f32.mrb[0].mxu0
    %802 = vmatprep.mubr.bf16.mxu0 0
    %803 = vmatmul.mubr.bf16.gmra.mrb[0].mxu0 %v648
    %v804 = vpop.f32.mrb[0].mxu0
    %v805 = vadd.f32 %v680, %v804
    %v806 = vpop.f32.mrb[0].mxu0
    %v807 = vpop.f32.mrb[0].mxu0
    %v808 = vadd.f32 %v680, %v807
    %v809 = vpop.f32.mrb[0].mxu0
    %810 = vmatprep.mubr.bf16.mxu0 0
    %811 = vmatmul.mubr.bf16.gmra.mrb[0].mxu0 %v649
    %v812 = vpop.f32.mrb[0].mxu0
    %v813 = vadd.f32 %v680, %v812
    %v814 = vpop.f32.mrb[0].mxu0
    %v815 = vpop.f32.mrb[0].mxu0
    %v816 = vadd.f32 %v680, %v815
    %v817 = vpop.f32.mrb[0].mxu0
    %818 = vmatprep.mubr.bf16.mxu0 0
    %819 = vmatmul.mubr.bf16.gmra.mrb[0].mxu0 %v650
    %v820 = vpop.f32.mrb[0].mxu0
    %v821 = vadd.f32 %v680, %v820
    %v822 = vpop.f32.mrb[0].mxu0
    %v823 = vpop.f32.mrb[0].mxu0
    %v824 = vadd.f32 %v680, %v823
    %v825 = vpop.f32.mrb[0].mxu0
    %826 = vmatprep.mubr.bf16.mxu0 0
    %827 = vmatmul.mubr.bf16.gmra.mrb[0].mxu0 %v651
    %v828 = vpop.f32.mrb[0].mxu0
    %v829 = vadd.f32 %v680, %v828
    %v830 = vpop.f32.mrb[0].mxu0
    %v831 = vpop.f32.mrb[0].mxu0
    %v832 = vadd.f32 %v680, %v831
    %v833 = vpop.f32.mrb[0].mxu0
    %834 = vmatprep.mubr.bf16.mxu0 0
    %835 = vmatmul.mubr.bf16.gmra.mrb[0].mxu0 %v652
    %v836 = vpop.f32.mrb[0].mxu0
    %v837 = vadd.f32 %v680, %v836
    %v838 = vpop.f32.mrb[0].mxu0
    %v839 = vpop.f32.mrb[0].mxu0
    %v840 = vadd.f32 %v680, %v839
    %v841 = vpop.f32.mrb[0].mxu0
    %842 = vmatprep.mubr.bf16.mxu0 0
    %843 = vmatmul.mubr.bf16.gmra.mrb[0].mxu0 %v653
    %v844 = vpop.f32.mrb[0].mxu0
    %v845 = vadd.f32 %v680, %v844
    %v846 = vpop.f32.mrb[0].mxu0
    %v847 = vpop.f32.mrb[0].mxu0
    %v848 = vadd.f32 %v680, %v847
    %v849 = vpop.f32.mrb[0].mxu0
    %850 = vmatprep.mubr.bf16.mxu0 0
    %851 = vmatmul.mubr.bf16.gmra.mrb[0].mxu0 %v654
    %v852 = vpop.f32.mrb[0].mxu0
    %v853 = vadd.f32 %v680, %v852
    %v854 = vpop.f32.mrb[0].mxu0
    %v855 = vpop.f32.mrb[0].mxu0
    %v856 = vadd.f32 %v680, %v855
    %v857 = vpop.f32.mrb[0].mxu0
    %858 = vmatprep.mubr.bf16.mxu0 0
    %859 = vmatmul.mubr.bf16.gmra.mrb[0].mxu0 %v655
    %v860 = vpop.f32.mrb[0].mxu0
    %v861 = vadd.f32 %v680, %v860
    %v862 = vpop.f32.mrb[0].mxu0
    %v863 = vpop.f32.mrb[0].mxu0
    %v864 = vadd.f32 %v680, %v863
    %v865 = vpop.f32.mrb[0].mxu0
    %866 = vmatprep.mubr.bf16.mxu0 0
    %867 = vmatmul.mubr.bf16.gmra.mrb[0].mxu0 %v656
    %v868 = vpop.f32.mrb[0].mxu0
    %v869 = vadd.f32 %v680, %v868
    %v870 = vpop.f32.mrb[0].mxu0
    %v871 = vpop.f32.mrb[0].mxu0
    %v872 = vadd.f32 %v680, %v871
    %v873 = vpop.f32.mrb[0].mxu0
    %874 = vmatprep.mubr.bf16.mxu0 0
    %875 = vmatmul.mubr.bf16.gmra.mrb[0].mxu0 %v657
    %v876 = vpop.f32.mrb[0].mxu0
    %v877 = vadd.f32 %v680, %v876
    %v878 = vpop.f32.mrb[0].mxu0
    %v879 = vpop.f32.mrb[0].mxu0
    %v880 = vadd.f32 %v680, %v879
    %v881 = vpop.f32.mrb[0].mxu0
    %882 = vmatprep.mubr.bf16.mxu0 0
    %883 = vmatmul.mubr.bf16.gmra.mrb[0].mxu0 %v658
    %v884 = vpop.f32.mrb[0].mxu0
    %v885 = vadd.f32 %v680, %v884
    %v886 = vpop.f32.mrb[0].mxu0
    %v887 = vpop.f32.mrb[0].mxu0
    %v888 = vadd.f32 %v680, %v887
    %v889 = vpop.f32.mrb[0].mxu0
    %890 = vdwg.mxu0
    %vm891 = vcmp.gt.f32.partialorder %v765, 0.0
    %vm892 = vcmp.gt.f32.partialorder %v768, 0.0
    %vm893 = vcmp.gt.f32.partialorder %v773, 0.0
    %vm894 = vcmp.gt.f32.partialorder %v776, 0.0
    %vm895 = vcmp.gt.f32.partialorder %v781, 0.0
    %vm896 = vcmp.gt.f32.partialorder %v784, 0.0
    %vm897 = vcmp.gt.f32.partialorder %v789, 0.0
    %vm898 = vcmp.gt.f32.partialorder %v792, 0.0
    %vm899 = vcmp.gt.f32.partialorder %v797, 0.0
    %vm900 = vcmp.gt.f32.partialorder %v800, 0.0
    %vm901 = vcmp.gt.f32.partialorder %v805, 0.0
    %vm902 = vcmp.gt.f32.partialorder %v808, 0.0
    %vm903 = vcmp.gt.f32.partialorder %v813, 0.0
    %vm904 = vcmp.gt.f32.partialorder %v816, 0.0
    %vm905 = vcmp.gt.f32.partialorder %v821, 0.0
    %vm906 = vcmp.gt.f32.partialorder %v824, 0.0
    %vm907 = vcmp.gt.f32.partialorder %v829, 0.0
    %vm908 = vcmp.gt.f32.partialorder %v832, 0.0
    %vm909 = vcmp.gt.f32.partialorder %v837, 0.0
    %vm910 = vcmp.gt.f32.partialorder %v840, 0.0
    %vm911 = vcmp.gt.f32.partialorder %v845, 0.0
    %vm912 = vcmp.gt.f32.partialorder %v848, 0.0
    %vm913 = vcmp.gt.f32.partialorder %v853, 0.0
    %vm914 = vcmp.gt.f32.partialorder %v856, 0.0
    %vm915 = vcmp.gt.f32.partialorder %v861, 0.0
    %vm916 = vcmp.gt.f32.partialorder %v864, 0.0
    %vm917 = vcmp.gt.f32.partialorder %v869, 0.0
    %vm918 = vcmp.gt.f32.partialorder %v872, 0.0
    %vm919 = vcmp.gt.f32.partialorder %v877, 0.0
    %vm920 = vcmp.gt.f32.partialorder %v880, 0.0
    %vm921 = vcmp.gt.f32.partialorder %v885, 0.0
    %vm922 = vcmp.gt.f32.partialorder %v888, 0.0
    %v923 = vmul.f32 %v765, 1.442695
    %v924 = vpow.pop %v923
    %v925 = vmul.f32 %v768, 1.442695
    %v926 = vpow.pop %v925
    %v927 = vmul.f32 %v773, 1.442695
    %v928 = vpow.pop %v927
    %v929 = vmul.f32 %v776, 1.442695
    %v930 = vpow.pop %v929
    %v931 = vmul.f32 %v781, 1.442695
    %v932 = vpow.pop %v931
    %v933 = vmul.f32 %v784, 1.442695
    %v934 = vpow.pop %v933
    %v935 = vmul.f32 %v789, 1.442695
    %v936 = vpow.pop %v935
    %v937 = vmul.f32 %v792, 1.442695
    %v938 = vpow.pop %v937
    %v939 = vmul.f32 %v797, 1.442695
    %v940 = vpow.pop %v939
    %v941 = vmul.f32 %v800, 1.442695
    %v942 = vpow.pop %v941
    %v943 = vmul.f32 %v805, 1.442695
    %v944 = vpow.pop %v943
    %v945 = vmul.f32 %v808, 1.442695
    %v946 = vpow.pop %v945
    %v947 = vmul.f32 %v813, 1.442695
    %v948 = vpow.pop %v947
    %v949 = vmul.f32 %v816, 1.442695
    %v950 = vpow.pop %v949
    %v951 = vmul.f32 %v821, 1.442695
    %v952 = vpow.pop %v951
    %v953 = vmul.f32 %v824, 1.442695
    %v954 = vpow.pop %v953
    %v955 = vmul.f32 %v829, 1.442695
    %v956 = vpow.pop %v955
    %v957 = vmul.f32 %v832, 1.442695
    %v958 = vpow.pop %v957
    %v959 = vmul.f32 %v837, 1.442695
    %v960 = vpow.pop %v959
    %v961 = vmul.f32 %v840, 1.442695
    %v962 = vpow.pop %v961
    %v963 = vmul.f32 %v845, 1.442695
    %v964 = vpow.pop %v963
    %v965 = vmul.f32 %v848, 1.442695
    %v966 = vpow.pop %v965
    %v967 = vmul.f32 %v853, 1.442695
    %v968 = vpow.pop %v967
    %v969 = vmul.f32 %v856, 1.442695
    %v970 = vpow.pop %v969
    %v971 = vmul.f32 %v861, 1.442695
    %v972 = vpow.pop %v971
    %v973 = vmul.f32 %v864, 1.442695
    %v974 = vpow.pop %v973
    %v975 = vmul.f32 %v869, 1.442695
    %v976 = vpow.pop %v975
    %v977 = vmul.f32 %v872, 1.442695
    %v978 = vpow.pop %v977
    %v979 = vmul.f32 %v877, 1.442695
    %v980 = vpow.pop %v979
    %v981 = vmul.f32 %v880, 1.442695
    %v982 = vpow.pop %v981
    %v983 = vmul.f32 %v885, 1.442695
    %v984 = vpow.pop %v983
    %v985 = vmul.f32 %v888, 1.442695
    %v986 = vpow.pop %v985
    %v987 = vsub.f32 %v924, 1.0
    %v988 = vsub.f32 %v926, 1.0
    %v989 = vsub.f32 %v928, 1.0
    %v990 = vsub.f32 %v930, 1.0
    %v991 = vsub.f32 %v932, 1.0
    %v992 = vsub.f32 %v934, 1.0
    %v993 = vsub.f32 %v936, 1.0
    %v994 = vsub.f32 %v938, 1.0
    %v995 = vsub.f32 %v940, 1.0
    %v996 = vsub.f32 %v942, 1.0
    %v997 = vsub.f32 %v944, 1.0
    %v998 = vsub.f32 %v946, 1.0
    %v999 = vsub.f32 %v948, 1.0
    %v1000 = vsub.f32 %v950, 1.0
    %v1001 = vsub.f32 %v952, 1.0
    %v1002 = vsub.f32 %v954, 1.0
    %v1003 = vsub.f32 %v956, 1.0
    %v1004 = vsub.f32 %v958, 1.0
    %v1005 = vsub.f32 %v960, 1.0
    %v1006 = vsub.f32 %v962, 1.0
    %v1007 = vsub.f32 %v964, 1.0
    %v1008 = vsub.f32 %v966, 1.0
    %v1009 = vsub.f32 %v968, 1.0
    %v1010 = vsub.f32 %v970, 1.0
    %v1011 = vsub.f32 %v972, 1.0
    %v1012 = vsub.f32 %v974, 1.0
    %v1013 = vsub.f32 %v976, 1.0
    %v1014 = vsub.f32 %v978, 1.0
    %v1015 = vsub.f32 %v980, 1.0
    %v1016 = vsub.f32 %v982, 1.0
    %v1017 = vsub.f32 %v984, 1.0
    %v1018 = vsub.f32 %v986, 1.0
    %v1019 = vmul.f32 %v987, 0.2
    %v1020 = vmul.f32 %v988, 0.2
    %v1021 = vmul.f32 %v989, 0.2
    %v1022 = vmul.f32 %v990, 0.2
    %v1023 = vmul.f32 %v991, 0.2
    %v1024 = vmul.f32 %v992, 0.2
    %v1025 = vmul.f32 %v993, 0.2
    %v1026 = vmul.f32 %v994, 0.2
    %v1027 = vmul.f32 %v995, 0.2
    %v1028 = vmul.f32 %v996, 0.2
    %v1029 = vmul.f32 %v997, 0.2
    %v1030 = vmul.f32 %v998, 0.2
    %v1031 = vmul.f32 %v999, 0.2
    %v1032 = vmul.f32 %v1000, 0.2
    %v1033 = vmul.f32 %v1001, 0.2
    %v1034 = vmul.f32 %v1002, 0.2
    %v1035 = vmul.f32 %v1003, 0.2
    %v1036 = vmul.f32 %v1004, 0.2
    %v1037 = vmul.f32 %v1005, 0.2
    %v1038 = vmul.f32 %v1006, 0.2
    %v1039 = vmul.f32 %v1007, 0.2
    %v1040 = vmul.f32 %v1008, 0.2
    %v1041 = vmul.f32 %v1009, 0.2
    %v1042 = vmul.f32 %v1010, 0.2
    %v1043 = vmul.f32 %v1011, 0.2
    %v1044 = vmul.f32 %v1012, 0.2
    %v1045 = vmul.f32 %v1013, 0.2
    %v1046 = vmul.f32 %v1014, 0.2
    %v1047 = vmul.f32 %v1015, 0.2
    %v1048 = vmul.f32 %v1016, 0.2
    %v1049 = vmul.f32 %v1017, 0.2
    %v1050 = vmul.f32 %v1018, 0.2
    %v1051 = vsel %vm891, %v765, %v1019
    %v1052 = vsel %vm892, %v768, %v1020
    %v1053 = vsel %vm893, %v773, %v1021
    %v1054 = vsel %vm894, %v776, %v1022
    %v1055 = vsel %vm895, %v781, %v1023
    %v1056 = vsel %vm896, %v784, %v1024
    %v1057 = vsel %vm897, %v789, %v1025
    %v1058 = vsel %vm898, %v792, %v1026
    %v1059 = vsel %vm899, %v797, %v1027
    %v1060 = vsel %vm900, %v800, %v1028
    %v1061 = vsel %vm901, %v805, %v1029
    %v1062 = vsel %vm902, %v808, %v1030
    %v1063 = vsel %vm903, %v813, %v1031
    %v1064 = vsel %vm904, %v816, %v1032
    %v1065 = vsel %vm905, %v821, %v1033
    %v1066 = vsel %vm906, %v824, %v1034
    %v1067 = vsel %vm907, %v829, %v1035
    %v1068 = vsel %vm908, %v832, %v1036
    %v1069 = vsel %vm909, %v837, %v1037
    %v1070 = vsel %vm910, %v840, %v1038
    %v1071 = vsel %vm911, %v845, %v1039
    %v1072 = vsel %vm912, %v848, %v1040
    %v1073 = vsel %vm913, %v853, %v1041
    %v1074 = vsel %vm914, %v856, %v1042
    %v1075 = vsel %vm915, %v861, %v1043
    %v1076 = vsel %vm916, %v864, %v1044
    %v1077 = vsel %vm917, %v869, %v1045
    %v1078 = vsel %vm918, %v872, %v1046
    %v1079 = vsel %vm919, %v877, %v1047
    %v1080 = vsel %vm920, %v880, %v1048
    %v1081 = vsel %vm921, %v885, %v1049
    %v1082 = vsel %vm922, %v888, %v1050
    %v1083 = vpack.c.bf16 %v1052, %v1051
    %v1084 = vpack.c.bf16 %v1054, %v1053
    %v1085 = vpack.c.bf16 %v1056, %v1055
    %v1086 = vpack.c.bf16 %v1058, %v1057
    %v1087 = vpack.c.bf16 %v1060, %v1059
    %v1088 = vpack.c.bf16 %v1062, %v1061
    %v1089 = vpack.c.bf16 %v1064, %v1063
    %v1090 = vpack.c.bf16 %v1066, %v1065
    %v1091 = vpack.c.bf16 %v1068, %v1067
    %v1092 = vpack.c.bf16 %v1070, %v1069
    %v1093 = vpack.c.bf16 %v1072, %v1071
    %v1094 = vpack.c.bf16 %v1074, %v1073
    %v1095 = vpack.c.bf16 %v1076, %v1075
    %v1096 = vpack.c.bf16 %v1078, %v1077
    %v1097 = vpack.c.bf16 %v1080, %v1079
    %v1098 = vpack.c.bf16 %v1082, %v1081
    %v1099 = vld [vmem:[#allocation9] sm:$0xf]
    %v1100 = vld [vmem:[#allocation9 + $0x4] sm:$0xf]
    %v1101 = vld [vmem:[#allocation9 + $0x8] sm:$0xf]
    %v1102 = vld [vmem:[#allocation9 + $0xc] sm:$0xf]
    %v1103 = vld [vmem:[#allocation9 + $0x10] sm:$0xf]
    %v1104 = vld [vmem:[#allocation9 + $0x14] sm:$0xf]
    %v1105 = vld [vmem:[#allocation9 + $0x18] sm:$0xf]
    %v1106 = vld [vmem:[#allocation9 + $0x1c] sm:$0xf]
    %v1107 = vld [vmem:[#allocation9 + $0x20] sm:$0xf]
    %v1108 = vld [vmem:[#allocation9 + $0x24] sm:$0xf]
    %v1109 = vld [vmem:[#allocation9 + $0x28] sm:$0xf]
    %v1110 = vld [vmem:[#allocation9 + $0x2c] sm:$0xf]
    %v1111 = vld [vmem:[#allocation9 + $0x30] sm:$0xf]
    %v1112 = vld [vmem:[#allocation9 + $0x34] sm:$0xf]
    %v1113 = vld [vmem:[#allocation9 + $0x38] sm:$0xf]
    %v1114 = vld [vmem:[#allocation9 + $0x3c] sm:$0xf]
    %v1115 = vld [vmem:[%s6] sm:$0x1]
    %v1117 = vlaneseq
    %v1118 = vshrl.u32 %v1117, 7
    %v1119 = vsub.s32 0, %v1118
    %v1120 = vrot.slane %v1115, %v1119
    %v1138 = vunpack.c.l.b16 %v1099
    %v1139 = vunpack.c.l.b16 %v1100
    %v1140 = vunpack.c.l.b16 %v1101
    %v1141 = vunpack.c.l.b16 %v1102
    %v1142 = vunpack.c.l.b16 %v1103
    %v1143 = vunpack.c.l.b16 %v1104
    %v1144 = vunpack.c.l.b16 %v1105
    %v1145 = vunpack.c.l.b16 %v1106
    %v1146 = vunpack.c.l.b16 %v1107
    %v1147 = vunpack.c.l.b16 %v1108
    %v1148 = vunpack.c.l.b16 %v1109
    %v1149 = vunpack.c.l.b16 %v1110
    %v1150 = vunpack.c.l.b16 %v1111
    %v1151 = vunpack.c.l.b16 %v1112
    %v1152 = vunpack.c.l.b16 %v1113
    %v1153 = vunpack.c.l.b16 %v1114
    %v1154 = vpack.c.b16 %v1139, %v1138
    %v1155 = vpack.c.b16 %v1141, %v1140
    %v1156 = vpack.c.b16 %v1143, %v1142
    %v1157 = vpack.c.b16 %v1145, %v1144
    %v1158 = vpack.c.b16 %v1147, %v1146
    %v1159 = vpack.c.b16 %v1149, %v1148
    %v1160 = vpack.c.b16 %v1151, %v1150
    %v1161 = vpack.c.b16 %v1153, %v1152
    %1170 = vmatprep.subr.bf16.mxu0 0
    %1171 = vmatpush1.bf16.msra.mxu0 %v1154
    %1172 = vmatprep.subr.bf16.mxu0 0
    %1173 = vmatpush1.bf16.msra.mxu0 %v1155
    %1174 = vmatprep.subr.bf16.mxu0 0
    %1175 = vmatpush1.bf16.msra.mxu0 %v1156
    %1176 = vmatprep.subr.bf16.mxu0 0
    %1177 = vmatpush1.bf16.msra.mxu0 %v1157
    %1178 = vmatprep.subr.bf16.mxu0 0
    %1179 = vmatpush1.bf16.msra.mxu0 %v1158
    %1180 = vmatprep.subr.bf16.mxu0 0
    %1181 = vmatpush1.bf16.msra.mxu0 %v1159
    %1182 = vmatprep.subr.bf16.mxu0 0
    %1183 = vmatpush1.bf16.msra.mxu0 %v1160
    %1184 = vmatprep.subr.bf16.mxu0 0
    %1185 = vmatpush1.bf16.msra.mxu0 %v1161
    %1186 = vmatprep.subr.bf16.mxu0 0
    %1187 = vmatpush1.bf16.msra.mxu0 0
    %1188 = vmatprep.subr.bf16.mxu0 0
    %1189 = vmatpush1.bf16.msra.mxu0 0
    %1190 = vmatprep.subr.bf16.mxu0 0
    %1191 = vmatpush1.bf16.msra.mxu0 0
    %1192 = vmatprep.subr.bf16.mxu0 0
    %1193 = vmatpush1.bf16.msra.mxu0 0
    %1194 = vmatprep.subr.bf16.mxu0 0
    %1195 = vmatpush1.bf16.msra.mxu0 0
    %1196 = vmatprep.subr.bf16.mxu0 0
    %1197 = vmatpush1.bf16.msra.mxu0 0
    %1198 = vmatprep.subr.bf16.mxu0 0
    %1199 = vmatpush1.bf16.msra.mxu0 0
    %1200 = vmatprep.subr.bf16.mxu0 0
    %1201 = vmatpush1.bf16.msra.mxu0 0
    %1202 = vmatprep.mubr.bf16.mxu0 0
    %1203 = vmatmul.mubr.bf16.gmra.mrb[0].mxu0 %v1083
    %v1204 = vpop.f32.mrb[0].mxu0
    %v1205 = vadd.f32 %v1120, %v1204
    %v1206 = vpop.f32.mrb[0].mxu0
    %v1207 = vpop.f32.mrb[0].mxu0
    %v1208 = vadd.f32 %v1120, %v1207
    %v1209 = vpop.f32.mrb[0].mxu0
    %1210 = vmatprep.mubr.bf16.mxu0 0
    %1211 = vmatmul.mubr.bf16.gmra.mrb[0].mxu0 %v1084
    %v1212 = vpop.f32.mrb[0].mxu0
    %v1213 = vadd.f32 %v1120, %v1212
    %v1214 = vpop.f32.mrb[0].mxu0
    %v1215 = vpop.f32.mrb[0].mxu0
    %v1216 = vadd.f32 %v1120, %v1215
    %v1217 = vpop.f32.mrb[0].mxu0
    %1218 = vmatprep.mubr.bf16.mxu0 0
    %1219 = vmatmul.mubr.bf16.gmra.mrb[0].mxu0 %v1085
    %v1220 = vpop.f32.mrb[0].mxu0
    %v1221 = vadd.f32 %v1120, %v1220
    %v1222 = vpop.f32.mrb[0].mxu0
    %v1223 = vpop.f32.mrb[0].mxu0
    %v1224 = vadd.f32 %v1120, %v1223
    %v1225 = vpop.f32.mrb[0].mxu0
    %1226 = vmatprep.mubr.bf16.mxu0 0
    %1227 = vmatmul.mubr.bf16.gmra.mrb[0].mxu0 %v1086
    %v1228 = vpop.f32.mrb[0].mxu0
    %v1229 = vadd.f32 %v1120, %v1228
    %v1230 = vpop.f32.mrb[0].mxu0
    %v1231 = vpop.f32.mrb[0].mxu0
    %v1232 = vadd.f32 %v1120, %v1231
    %v1233 = vpop.f32.mrb[0].mxu0
    %1234 = vmatprep.mubr.bf16.mxu0 0
    %1235 = vmatmul.mubr.bf16.gmra.mrb[0].mxu0 %v1087
    %v1236 = vpop.f32.mrb[0].mxu0
    %v1237 = vadd.f32 %v1120, %v1236
    %v1238 = vpop.f32.mrb[0].mxu0
    %v1239 = vpop.f32.mrb[0].mxu0
    %v1240 = vadd.f32 %v1120, %v1239
    %v1241 = vpop.f32.mrb[0].mxu0
    %1242 = vmatprep.mubr.bf16.mxu0 0
    %1243 = vmatmul.mubr.bf16.gmra.mrb[0].mxu0 %v1088
    %v1244 = vpop.f32.mrb[0].mxu0
    %v1245 = vadd.f32 %v1120, %v1244
    %v1246 = vpop.f32.mrb[0].mxu0
    %v1247 = vpop.f32.mrb[0].mxu0
    %v1248 = vadd.f32 %v1120, %v1247
    %v1249 = vpop.f32.mrb[0].mxu0
    %1250 = vmatprep.mubr.bf16.mxu0 0
    %1251 = vmatmul.mubr.bf16.gmra.mrb[0].mxu0 %v1089
    %v1252 = vpop.f32.mrb[0].mxu0
    %v1253 = vadd.f32 %v1120, %v1252
    %v1254 = vpop.f32.mrb[0].mxu0
    %v1255 = vpop.f32.mrb[0].mxu0
    %v1256 = vadd.f32 %v1120, %v1255
    %v1257 = vpop.f32.mrb[0].mxu0
    %1258 = vmatprep.mubr.bf16.mxu0 0
    %1259 = vmatmul.mubr.bf16.gmra.mrb[0].mxu0 %v1090
    %v1260 = vpop.f32.mrb[0].mxu0
    %v1261 = vadd.f32 %v1120, %v1260
    %v1262 = vpop.f32.mrb[0].mxu0
    %v1263 = vpop.f32.mrb[0].mxu0
    %v1264 = vadd.f32 %v1120, %v1263
    %v1265 = vpop.f32.mrb[0].mxu0
    %1266 = vmatprep.mubr.bf16.mxu0 0
    %1267 = vmatmul.mubr.bf16.gmra.mrb[0].mxu0 %v1091
    %v1268 = vpop.f32.mrb[0].mxu0
    %v1269 = vadd.f32 %v1120, %v1268
    %v1270 = vpop.f32.mrb[0].mxu0
    %v1271 = vpop.f32.mrb[0].mxu0
    %v1272 = vadd.f32 %v1120, %v1271
    %v1273 = vpop.f32.mrb[0].mxu0
    %1274 = vmatprep.mubr.bf16.mxu0 0
    %1275 = vmatmul.mubr.bf16.gmra.mrb[0].mxu0 %v1092
    %v1276 = vpop.f32.mrb[0].mxu0
    %v1277 = vadd.f32 %v1120, %v1276
    %v1278 = vpop.f32.mrb[0].mxu0
    %v1279 = vpop.f32.mrb[0].mxu0
    %v1280 = vadd.f32 %v1120, %v1279
    %v1281 = vpop.f32.mrb[0].mxu0
    %1282 = vmatprep.mubr.bf16.mxu0 0
    %1283 = vmatmul.mubr.bf16.gmra.mrb[0].mxu0 %v1093
    %v1284 = vpop.f32.mrb[0].mxu0
    %v1285 = vadd.f32 %v1120, %v1284
    %v1286 = vpop.f32.mrb[0].mxu0
    %v1287 = vpop.f32.mrb[0].mxu0
    %v1288 = vadd.f32 %v1120, %v1287
    %v1289 = vpop.f32.mrb[0].mxu0
    %1290 = vmatprep.mubr.bf16.mxu0 0
    %1291 = vmatmul.mubr.bf16.gmra.mrb[0].mxu0 %v1094
    %v1292 = vpop.f32.mrb[0].mxu0
    %v1293 = vadd.f32 %v1120, %v1292
    %v1294 = vpop.f32.mrb[0].mxu0
    %v1295 = vpop.f32.mrb[0].mxu0
    %v1296 = vadd.f32 %v1120, %v1295
    %v1297 = vpop.f32.mrb[0].mxu0
    %1298 = vmatprep.mubr.bf16.mxu0 0
    %1299 = vmatmul.mubr.bf16.gmra.mrb[0].mxu0 %v1095
    %v1300 = vpop.f32.mrb[0].mxu0
    %v1301 = vadd.f32 %v1120, %v1300
    %v1302 = vpop.f32.mrb[0].mxu0
    %v1303 = vpop.f32.mrb[0].mxu0
    %v1304 = vadd.f32 %v1120, %v1303
    %v1305 = vpop.f32.mrb[0].mxu0
    %1306 = vmatprep.mubr.bf16.mxu0 0
    %1307 = vmatmul.mubr.bf16.gmra.mrb[0].mxu0 %v1096
    %v1308 = vpop.f32.mrb[0].mxu0
    %v1309 = vadd.f32 %v1120, %v1308
    %v1310 = vpop.f32.mrb[0].mxu0
    %v1311 = vpop.f32.mrb[0].mxu0
    %v1312 = vadd.f32 %v1120, %v1311
    %v1313 = vpop.f32.mrb[0].mxu0
    %1314 = vmatprep.mubr.bf16.mxu0 0
    %1315 = vmatmul.mubr.bf16.gmra.mrb[0].mxu0 %v1097
    %v1316 = vpop.f32.mrb[0].mxu0
    %v1317 = vadd.f32 %v1120, %v1316
    %v1318 = vpop.f32.mrb[0].mxu0
    %v1319 = vpop.f32.mrb[0].mxu0
    %v1320 = vadd.f32 %v1120, %v1319
    %v1321 = vpop.f32.mrb[0].mxu0
    %1322 = vmatprep.mubr.bf16.mxu0 0
    %1323 = vmatmul.mubr.bf16.gmra.mrb[0].mxu0 %v1098
    %v1324 = vpop.f32.mrb[0].mxu0
    %v1325 = vadd.f32 %v1120, %v1324
    %v1326 = vpop.f32.mrb[0].mxu0
    %v1327 = vpop.f32.mrb[0].mxu0
    %v1328 = vadd.f32 %v1120, %v1327
    %v1329 = vpop.f32.mrb[0].mxu0
    %1330 = vdwg.mxu0
    %vm1331 = vcmp.gt.f32.partialorder %v1205, 0.0
    %vm1332 = vcmp.gt.f32.partialorder %v1208, 0.0
    %vm1333 = vcmp.gt.f32.partialorder %v1213, 0.0
    %vm1334 = vcmp.gt.f32.partialorder %v1216, 0.0
    %vm1335 = vcmp.gt.f32.partialorder %v1221, 0.0
    %vm1336 = vcmp.gt.f32.partialorder %v1224, 0.0
    %vm1337 = vcmp.gt.f32.partialorder %v1229, 0.0
    %vm1338 = vcmp.gt.f32.partialorder %v1232, 0.0
    %vm1339 = vcmp.gt.f32.partialorder %v1237, 0.0
    %vm1340 = vcmp.gt.f32.partialorder %v1240, 0.0
    %vm1341 = vcmp.gt.f32.partialorder %v1245, 0.0
    %vm1342 = vcmp.gt.f32.partialorder %v1248, 0.0
    %vm1343 = vcmp.gt.f32.partialorder %v1253, 0.0
    %vm1344 = vcmp.gt.f32.partialorder %v1256, 0.0
    %vm1345 = vcmp.gt.f32.partialorder %v1261, 0.0
    %vm1346 = vcmp.gt.f32.partialorder %v1264, 0.0
    %vm1347 = vcmp.gt.f32.partialorder %v1269, 0.0
    %vm1348 = vcmp.gt.f32.partialorder %v1272, 0.0
    %vm1349 = vcmp.gt.f32.partialorder %v1277, 0.0
    %vm1350 = vcmp.gt.f32.partialorder %v1280, 0.0
    %vm1351 = vcmp.gt.f32.partialorder %v1285, 0.0
    %vm1352 = vcmp.gt.f32.partialorder %v1288, 0.0
    %vm1353 = vcmp.gt.f32.partialorder %v1293, 0.0
    %vm1354 = vcmp.gt.f32.partialorder %v1296, 0.0
    %vm1355 = vcmp.gt.f32.partialorder %v1301, 0.0
    %vm1356 = vcmp.gt.f32.partialorder %v1304, 0.0
    %vm1357 = vcmp.gt.f32.partialorder %v1309, 0.0
    %vm1358 = vcmp.gt.f32.partialorder %v1312, 0.0
    %vm1359 = vcmp.gt.f32.partialorder %v1317, 0.0
    %vm1360 = vcmp.gt.f32.partialorder %v1320, 0.0
    %vm1361 = vcmp.gt.f32.partialorder %v1325, 0.0
    %vm1362 = vcmp.gt.f32.partialorder %v1328, 0.0
    %v1363 = vmul.f32 %v1205, 1.442695
    %v1364 = vpow.pop %v1363
    %v1365 = vmul.f32 %v1208, 1.442695
    %v1366 = vpow.pop %v1365
    %v1367 = vmul.f32 %v1213, 1.442695
    %v1368 = vpow.pop %v1367
    %v1369 = vmul.f32 %v1216, 1.442695
    %v1370 = vpow.pop %v1369
    %v1371 = vmul.f32 %v1221, 1.442695
    %v1372 = vpow.pop %v1371
    %v1373 = vmul.f32 %v1224, 1.442695
    %v1374 = vpow.pop %v1373
    %v1375 = vmul.f32 %v1229, 1.442695
    %v1376 = vpow.pop %v1375
    %v1377 = vmul.f32 %v1232, 1.442695
    %v1378 = vpow.pop %v1377
    %v1379 = vmul.f32 %v1237, 1.442695
    %v1380 = vpow.pop %v1379
    %v1381 = vmul.f32 %v1240, 1.442695
    %v1382 = vpow.pop %v1381
    %v1383 = vmul.f32 %v1245, 1.442695
    %v1384 = vpow.pop %v1383
    %v1385 = vmul.f32 %v1248, 1.442695
    %v1386 = vpow.pop %v1385
    %v1387 = vmul.f32 %v1253, 1.442695
    %v1388 = vpow.pop %v1387
    %v1389 = vmul.f32 %v1256, 1.442695
    %v1390 = vpow.pop %v1389
    %v1391 = vmul.f32 %v1261, 1.442695
    %v1392 = vpow.pop %v1391
    %v1393 = vmul.f32 %v1264, 1.442695
    %v1394 = vpow.pop %v1393
    %v1395 = vmul.f32 %v1269, 1.442695
    %v1396 = vpow.pop %v1395
    %v1397 = vmul.f32 %v1272, 1.442695
    %v1398 = vpow.pop %v1397
    %v1399 = vmul.f32 %v1277, 1.442695
    %v1400 = vpow.pop %v1399
    %v1401 = vmul.f32 %v1280, 1.442695
    %v1402 = vpow.pop %v1401
    %v1403 = vmul.f32 %v1285, 1.442695
    %v1404 = vpow.pop %v1403
    %v1405 = vmul.f32 %v1288, 1.442695
    %v1406 = vpow.pop %v1405
    %v1407 = vmul.f32 %v1293, 1.442695
    %v1408 = vpow.pop %v1407
    %v1409 = vmul.f32 %v1296, 1.442695
    %v1410 = vpow.pop %v1409
    %v1411 = vmul.f32 %v1301, 1.442695
    %v1412 = vpow.pop %v1411
    %v1413 = vmul.f32 %v1304, 1.442695
    %v1414 = vpow.pop %v1413
    %v1415 = vmul.f32 %v1309, 1.442695
    %v1416 = vpow.pop %v1415
    %v1417 = vmul.f32 %v1312, 1.442695
    %v1418 = vpow.pop %v1417
    %v1419 = vmul.f32 %v1317, 1.442695
    %v1420 = vpow.pop %v1419
    %v1421 = vmul.f32 %v1320, 1.442695
    %v1422 = vpow.pop %v1421
    %v1423 = vmul.f32 %v1325, 1.442695
    %v1424 = vpow.pop %v1423
    %v1425 = vmul.f32 %v1328, 1.442695
    %v1426 = vpow.pop %v1425
    %v1427 = vsub.f32 %v1364, 1.0
    %v1428 = vsub.f32 %v1366, 1.0
    %v1429 = vsub.f32 %v1368, 1.0
    %v1430 = vsub.f32 %v1370, 1.0
    %v1431 = vsub.f32 %v1372, 1.0
    %v1432 = vsub.f32 %v1374, 1.0
    %v1433 = vsub.f32 %v1376, 1.0
    %v1434 = vsub.f32 %v1378, 1.0
    %v1435 = vsub.f32 %v1380, 1.0
    %v1436 = vsub.f32 %v1382, 1.0
    %v1437 = vsub.f32 %v1384, 1.0
    %v1438 = vsub.f32 %v1386, 1.0
    %v1439 = vsub.f32 %v1388, 1.0
    %v1440 = vsub.f32 %v1390, 1.0
    %v1441 = vsub.f32 %v1392, 1.0
    %v1442 = vsub.f32 %v1394, 1.0
    %v1443 = vsub.f32 %v1396, 1.0
    %v1444 = vsub.f32 %v1398, 1.0
    %v1445 = vsub.f32 %v1400, 1.0
    %v1446 = vsub.f32 %v1402, 1.0
    %v1447 = vsub.f32 %v1404, 1.0
    %v1448 = vsub.f32 %v1406, 1.0
    %v1449 = vsub.f32 %v1408, 1.0
    %v1450 = vsub.f32 %v1410, 1.0
    %v1451 = vsub.f32 %v1412, 1.0
    %v1452 = vsub.f32 %v1414, 1.0
    %v1453 = vsub.f32 %v1416, 1.0
    %v1454 = vsub.f32 %v1418, 1.0
    %v1455 = vsub.f32 %v1420, 1.0
    %v1456 = vsub.f32 %v1422, 1.0
    %v1457 = vsub.f32 %v1424, 1.0
    %v1458 = vsub.f32 %v1426, 1.0
    %v1459 = vmul.f32 %v1427, 0.2
    %v1460 = vmul.f32 %v1428, 0.2
    %v1461 = vmul.f32 %v1429, 0.2
    %v1462 = vmul.f32 %v1430, 0.2
    %v1463 = vmul.f32 %v1431, 0.2
    %v1464 = vmul.f32 %v1432, 0.2
    %v1465 = vmul.f32 %v1433, 0.2
    %v1466 = vmul.f32 %v1434, 0.2
    %v1467 = vmul.f32 %v1435, 0.2
    %v1468 = vmul.f32 %v1436, 0.2
    %v1469 = vmul.f32 %v1437, 0.2
    %v1470 = vmul.f32 %v1438, 0.2
    %v1471 = vmul.f32 %v1439, 0.2
    %v1472 = vmul.f32 %v1440, 0.2
    %v1473 = vmul.f32 %v1441, 0.2
    %v1474 = vmul.f32 %v1442, 0.2
    %v1475 = vmul.f32 %v1443, 0.2
    %v1476 = vmul.f32 %v1444, 0.2
    %v1477 = vmul.f32 %v1445, 0.2
    %v1478 = vmul.f32 %v1446, 0.2
    %v1479 = vmul.f32 %v1447, 0.2
    %v1480 = vmul.f32 %v1448, 0.2
    %v1481 = vmul.f32 %v1449, 0.2
    %v1482 = vmul.f32 %v1450, 0.2
    %v1483 = vmul.f32 %v1451, 0.2
    %v1484 = vmul.f32 %v1452, 0.2
    %v1485 = vmul.f32 %v1453, 0.2
    %v1486 = vmul.f32 %v1454, 0.2
    %v1487 = vmul.f32 %v1455, 0.2
    %v1488 = vmul.f32 %v1456, 0.2
    %v1489 = vmul.f32 %v1457, 0.2
    %v1490 = vmul.f32 %v1458, 0.2
    %v1491 = vsel %vm1331, %v1205, %v1459
    %v1492 = vsel %vm1332, %v1208, %v1460
    %v1493 = vsel %vm1333, %v1213, %v1461
    %v1494 = vsel %vm1334, %v1216, %v1462
    %v1495 = vsel %vm1335, %v1221, %v1463
    %v1496 = vsel %vm1336, %v1224, %v1464
    %v1497 = vsel %vm1337, %v1229, %v1465
    %v1498 = vsel %vm1338, %v1232, %v1466
    %v1499 = vsel %vm1339, %v1237, %v1467
    %v1500 = vsel %vm1340, %v1240, %v1468
    %v1501 = vsel %vm1341, %v1245, %v1469
    %v1502 = vsel %vm1342, %v1248, %v1470
    %v1503 = vsel %vm1343, %v1253, %v1471
    %v1504 = vsel %vm1344, %v1256, %v1472
    %v1505 = vsel %vm1345, %v1261, %v1473
    %v1506 = vsel %vm1346, %v1264, %v1474
    %v1507 = vsel %vm1347, %v1269, %v1475
    %v1508 = vsel %vm1348, %v1272, %v1476
    %v1509 = vsel %vm1349, %v1277, %v1477
    %v1510 = vsel %vm1350, %v1280, %v1478
    %v1511 = vsel %vm1351, %v1285, %v1479
    %v1512 = vsel %vm1352, %v1288, %v1480
    %v1513 = vsel %vm1353, %v1293, %v1481
    %v1514 = vsel %vm1354, %v1296, %v1482
    %v1515 = vsel %vm1355, %v1301, %v1483
    %v1516 = vsel %vm1356, %v1304, %v1484
    %v1517 = vsel %vm1357, %v1309, %v1485
    %v1518 = vsel %vm1358, %v1312, %v1486
    %v1519 = vsel %vm1359, %v1317, %v1487
    %v1520 = vsel %vm1360, %v1320, %v1488
    %v1521 = vsel %vm1361, %v1325, %v1489
    %v1522 = vsel %vm1362, %v1328, %v1490
    %v1523 = vld [vmem:[%s7] sm:$0x1]
    %v1524 = vpack.c.bf16 %v1492, %v1491
    %v1525 = vpack.c.bf16 %v1494, %v1493
    %v1526 = vpack.c.bf16 %v1496, %v1495
    %v1527 = vpack.c.bf16 %v1498, %v1497
    %v1528 = vpack.c.bf16 %v1500, %v1499
    %v1529 = vpack.c.bf16 %v1502, %v1501
    %v1530 = vpack.c.bf16 %v1504, %v1503
    %v1531 = vpack.c.bf16 %v1506, %v1505
    %v1532 = vpack.c.bf16 %v1508, %v1507
    %v1533 = vpack.c.bf16 %v1510, %v1509
    %v1534 = vpack.c.bf16 %v1512, %v1511
    %v1535 = vpack.c.bf16 %v1514, %v1513
    %v1536 = vpack.c.bf16 %v1516, %v1515
    %v1537 = vpack.c.bf16 %v1518, %v1517
    %v1538 = vpack.c.bf16 %v1520, %v1519
    %v1539 = vpack.c.bf16 %v1522, %v1521
    %v1540 = vld [vmem:[#allocation2] sm:$0x1]
    %1542 = vset.pattern.permute.xlu0 0
    %1543 = vperm.xlu0 %1542, %v1540
    %v1544 = vpop.permute.xlu0 %1543
    %v1546 = vlaneseq
    %v1547 = vshrl.u32 %v1546, 7
    %v1548 = vsub.s32 0, %v1547
    %v1549 = vrot.slane %v1544, %v1548
    %1550 = vmatprep.subr.bf16.mxu0 0
    %1551 = vmatpush1.bf16.xpose.msra.mxu0 %v1524
    %1552 = vmatprep.subr.bf16.mxu0 0
    %1553 = vmatpush1.bf16.xpose.msra.mxu0 %v1525
    %1554 = vmatprep.subr.bf16.mxu0 0
    %1555 = vmatpush1.bf16.xpose.msra.mxu0 %v1526
    %1556 = vmatprep.subr.bf16.mxu0 0
    %1557 = vmatpush1.bf16.xpose.msra.mxu0 %v1527
    %1558 = vmatprep.subr.bf16.mxu0 0
    %1559 = vmatpush1.bf16.xpose.msra.mxu0 %v1528
    %1560 = vmatprep.subr.bf16.mxu0 0
    %1561 = vmatpush1.bf16.xpose.msra.mxu0 %v1529
    %1562 = vmatprep.subr.bf16.mxu0 0
    %1563 = vmatpush1.bf16.xpose.msra.mxu0 %v1530
    %1564 = vmatprep.subr.bf16.mxu0 0
    %1565 = vmatpush1.bf16.xpose.msra.mxu0 %v1531
    %1566 = vmatprep.subr.bf16.mxu0 0
    %1567 = vmatpush1.bf16.xpose.msra.mxu0 %v1532
    %1568 = vmatprep.subr.bf16.mxu0 0
    %1569 = vmatpush1.bf16.xpose.msra.mxu0 %v1533
    %1570 = vmatprep.subr.bf16.mxu0 0
    %1571 = vmatpush1.bf16.xpose.msra.mxu0 %v1534
    %1572 = vmatprep.subr.bf16.mxu0 0
    %1573 = vmatpush1.bf16.xpose.msra.mxu0 %v1535
    %1574 = vmatprep.subr.bf16.mxu0 0
    %1575 = vmatpush1.bf16.xpose.msra.mxu0 %v1536
    %1576 = vmatprep.subr.bf16.mxu0 0
    %1577 = vmatpush1.bf16.xpose.msra.mxu0 %v1537
    %1578 = vmatprep.subr.bf16.mxu0 0
    %1579 = vmatpush1.bf16.xpose.msra.mxu0 %v1538
    %1580 = vmatprep.subr.bf16.mxu0 0
    %1581 = vmatpush1.bf16.xpose.msra.mxu0 %v1539
    %1582 = vmatprep.mubr.bf16.mxu0 0
    %1583 = vmatmul.mubr.bf16.gmra.mrb[0].mxu0 %v1523
    %v1584 = vpop.f32.mrb[0].mxu0
    %v1585 = vadd.f32 %v1549, %v1584
    %v1586 = vpop.f32.mrb[0].mxu0
    %v1587 = vadd.f32 %v1549, %v1586
    %v1588 = vpop.f32.mrb[0].mxu0
    %v1589 = vpop.f32.mrb[0].mxu0
    %1590 = vdwg.mxu0
    %v1591 = vxor.u32 %v1585, 2147483648
    %v1592 = vxor.u32 %v1587, 2147483648
    %v1593 = vmul.f32 %v1591, 1.442695
    %v1594 = vpow.pop %v1593
    %v1595 = vmul.f32 %v1592, 1.442695
    %v1596 = vpow.pop %v1595
    %v1597 = vadd.f32 %v1594, 1.0
    %v1598 = vadd.f32 %v1596, 1.0
    %v1599 = vrcp.pop %v1597
    %v1600 = vmul.f32 1.0, %v1599
    %v1601 = vrcp.pop %v1598
    %v1602 = vmul.f32 1.0, %v1601
    %v1605 = vcombine.low %v1600, %v1602
    %v1607 = vunpack.c.l.s4 1966171168
    %v1608 = vunpack.c.0.s8 %v1607
    %v1609 = vlaneseq
    %v1610 = vshrl.u32 %v1609, 7
    %v1611 = vsub.s32 %v1608, %v1610
    %v1612 = vrot.slane %v1605, %v1611
    %v1614 = vunpack.c.l.s4 1966171168
    %v1615 = vunpack.c.0.s8 %v1614
    %v1616 = vlaneseq
    %v1617 = vshrl.u32 %v1616, 7
    %v1618 = vsub.s32 %v1615, %v1617
    %v1619 = vrot.slane %v1612, %v1618
    %v1621 = vlaneseq
    %vm1622 = vcmp.ge.s32.totalorder %v1621, 0
    %vm1623 = vcmp.lt.s32.totalorder %v1621, 256
    %vm1624 = vmand %vm1622, %vm1623
    %1625 = vst.msk [vmem:[#allocation11] sm:$0x3] %vm1624, %v1619
    // Predicated region
    $region54: #{tpu_custom_call.1} parent=1 // pred_check
      _
    $region55: #{tpu_custom_call.1} parent=1 // pred_check_branch
      %1627 = sbr.rel (0) target = $region57
    $region56: #{tpu_custom_call.1} parent=1 // pred_region
      %s1629 = ssub.s32 32, 32
      %1630 = vsyncadd [#allocation5], %s1629
      %s1632 = sshll.u32 [#allocation11], 4
      %s1633 = int_to_ptr.vmem [resolvable:$true] %s1632
      %1635 = dma.vmem_to_hbm [thread:$0]  %s1633, 32, %s9, [#allocation5]
    $region57: #{tpu_custom_call.1} parent=1 // pred_fallthru
      _
    // Predicated region
    $region58: #{tpu_custom_call.1} parent=1 // pred_check
      _
    $region59: #{tpu_custom_call.1} parent=1 // pred_check_branch
      %1637 = sbr.rel (0) target = $region61
    $region60: #{tpu_custom_call.1} parent=1 // pred_region
      %1638 = dma.done [#allocation5], 32
    $region61: #{tpu_custom_call.1} parent=1 // pred_fallthru
      _
    %1639 = vsyncpa [#allocation4], 1
    %1640 = vsyncpa [#allocation7], 1
    %1641 = vsyncpa [#allocation10], 1
    %1642 = vsyncpa [#allocation5], 1

</llo_original>
